<compile_context>
chip_gen: v6e
topology: v6e:2x2x1
jax: 0.10.0
libtpu: 0.0.40
codegen_flags: <defaults>
</compile_context>

<pallas_src>
import functools

import jax
import jax.numpy as jnp
from jax.experimental import pallas as pl
from jax.experimental.pallas import tpu as pltpu

LN_EPS = 1e-5
MXU_DTYPE = jnp.bfloat16     # MXU operand dtype; accumulation stays float32.


# ------------------------------ kernel --------------------------------------


def _pola_kernel(x_ref,
                 wqkv_ref, bqkv_ref,    # fused, pre-transposed QKV: (H, 3H) bf16, (1, 3H) f32
                 wo_ref, bo_ref,        # pre-transposed out proj:   (H, H)  bf16, (1, H)  f32
                 gamma_ref, beta_ref,   # LayerNorm affine:          (1, H), (1, H) f32
                 o_ref,
                 *, T, H):
    Bb = x_ref.shape[0]                 # batch elements handled this grid step
    rows = Bb * T
    scale = jnp.float32(H) ** jnp.float32(-0.5)

    # Flatten to (rows, H): every row-wise op (LN, projections) uses this view.
    x = x_ref[...].reshape(rows, H)

    # ---- LayerNorm over the hidden dim (f32) ----
    mean = jnp.mean(x, axis=-1, keepdims=True)
    var = jnp.mean(jnp.square(x - mean), axis=-1, keepdims=True)
    xn = (x - mean) * jax.lax.rsqrt(var + LN_EPS)
    xn = xn * gamma_ref[...] + beta_ref[...]

    # ---- Fused QKV projection: one (rows,H)x(H,3H) MXU matmul, bf16 in, f32 acc ----
    qkv = jnp.dot(xn.astype(MXU_DTYPE), wqkv_ref[...],
                  preferred_element_type=jnp.float32) + bqkv_ref[...]
    q = qkv[:, 0 * H:1 * H]
    k = qkv[:, 1 * H:2 * H]
    v = qkv[:, 2 * H:3 * H].reshape(Bb, T, H)

    # ---- Polarity split (relu(-x) == relu(x) - x) ----
    q_pos = jnp.maximum(q, 0.0)
    k_pos = jnp.maximum(k, 0.0)
    q_neg = q_pos - q
    k_neg = k_pos - k

    # ---- Both polarity branches stacked -> ONE batched score matmul + softmax ----
    q_cat = jnp.concatenate([q_pos.reshape(Bb, T, H), q_neg.reshape(Bb, T, H)], axis=0)
    k_cat = jnp.concatenate([k_pos.reshape(Bb, T, H), k_neg.reshape(Bb, T, H)], axis=0)
    s = jnp.einsum('bqd,bkd->bqk',
                   q_cat.astype(MXU_DTYPE), k_cat.astype(MXU_DTYPE),
                   preferred_element_type=jnp.float32) * scale
    s = s - jnp.max(s, axis=-1, keepdims=True)       # scores >= 0: max-sub is safe
    e = jnp.exp(s)
    a = e * pl.reciprocal(jnp.sum(e, axis=-1, keepdims=True), approx=True)

    # ---- (A_pos - A_neg) @ V: one matmul instead of two (linearity) ----
    a_diff = a[:Bb] - a[Bb:]
    attn_out = jnp.einsum('bqk,bkd->bqd',
                          a_diff.astype(MXU_DTYPE), v.astype(MXU_DTYPE),
                          preferred_element_type=jnp.float32)

    # ---- Output projection + residual (residual is the *normed* features) ----
    out2 = jnp.dot(attn_out.reshape(rows, H).astype(MXU_DTYPE), wo_ref[...],
                   preferred_element_type=jnp.float32) + bo_ref[...]
    y = xn + out2                                    # (rows, H) f32

    # Store in whatever layout the out_spec uses ((Bb,T,H) or lane-dense (Bb,T*H)).
    o_ref[...] = y.reshape(o_ref.shape)


# --------------------------- hardware helpers --------------------------------


def _tensorcores_per_chip():
    """2 on v7x (dual TensorCore), else 1.  Any failure -> 1 (safe default)."""
    try:
        kind = jax.devices()[0].device_kind.lower()
    except Exception:
        return 1
    return 2 if ("v7" in kind or "7x" in kind) else 1


def _vmem_capacity_bytes():
    """Physical VMEM; fall back to the smallest current generation (v7x, 64 MiB)."""
    try:
        return int(pltpu.get_tpu_info().vmem_capacity_bytes)
    except Exception:
        return 64 << 20


def _pick_batch_block(B, T, *, target_rows=256, num_cores=1):
    """Largest divisor Bb of B with Bb*T <= target_rows (fills the MXU M dim).

    On multi-TensorCore chips (v7x) prefer a Bb whose step count is a multiple
    of num_cores so both cores get equal work - but only when that does not
    starve the MXU (Bb*T >= 128), or when even the unsplit block is tiny.
    On single-core chips (v5e/v6e) the grid is a serial loop: never split just
    to get more steps.
    """
    divisors = [d for d in range(1, B + 1) if B % d == 0]
    fitting = [d for d in divisors if d * T <= target_rows] or [1]
    bb = max(fitting)
    if num_cores > 1:
        balanced = [d for d in fitting
                    if (B // d) >= num_cores and (B // d) % num_cores == 0]
        if balanced:
            best = max(balanced)
            if best * T >= 128 or bb * T < 128:
                bb = best
    return bb


# ------------------------------ wrapper --------------------------------------


def pola_linear_attention(features, params, *, batch_block=None,
                          fold_tasks_into_lanes=None,
                          single_buffer_consts=True):
    """features: (B, T, H) float32; params: dict of weights/biases (PyTorch layout)."""
    B, T, H = features.shape
    num_cores = _tensorcores_per_chip()
    Bb = batch_block if batch_block is not None else _pick_batch_block(
        B, T, num_cores=num_cores)
    assert B % Bb == 0, "batch_block must divide batch"
    grid = (B // Bb,)

    # Lane-dense I/O: H < 128 leaves most of every vreg lane-masked and forces
    # masked stores; fold the task dim into the last dim when T*H is a multiple
    # of 128 and the folded block keeps a legal sublane extent.
    if fold_tasks_into_lanes is None:
        fold_tasks_into_lanes = (H % 128 != 0 and (T * H) % 128 == 0
                                 and (Bb == B or Bb % 8 == 0))

    # Pre-transpose + fuse projection weights once in the wrapper (no on-chip
    # transposes) and cast MXU operands to bf16 (f32 accumulation in-kernel).
    wqkv = jnp.concatenate([params["wq"].T, params["wk"].T, params["wv"].T],
                           axis=1).astype(MXU_DTYPE)                 # (H, 3H)
    bqkv = jnp.concatenate([params["bq"], params["bk"], params["bv"]],
                           axis=1).astype(jnp.float32)               # (1, 3H)
    wo_t = params["wo"].T.astype(MXU_DTYPE)                          # (H, H)
    bo = params["bo"].astype(jnp.float32)
    gamma = params["ln_gamma"].astype(jnp.float32)
    beta = params["ln_beta"].astype(jnp.float32)

    def const_spec(shape):
        zeros = (0,) * len(shape)
        if single_buffer_consts:
            # These blocks never change across the grid: single-buffer them so
            # they don't burn 2x VMEM (matters most on v7x's 64 MiB VMEM).
            return pl.BlockSpec(shape, lambda *_: zeros,
                                pipeline_mode=pl.Buffered(1))
        return pl.BlockSpec(shape, lambda *_: zeros)

    if fold_tasks_into_lanes:
        x_in = features.reshape(B, T * H)
        feat_block = (Bb, T * H)
        feat_map = lambda b: (b, 0)
        out_shape = jax.ShapeDtypeStruct((B, T * H), jnp.float32)
    else:
        x_in = features
        feat_block = (Bb, T, H)
        feat_map = lambda b: (b, 0, 0)
        out_shape = jax.ShapeDtypeStruct((B, T, H), jnp.float32)

    # --- advisory cost estimate ---------------------------------------------
    rows_total = B * T
    flops = (2 * rows_total * H * 3 * H          # fused QKV projection
             + 2 * 2 * B * T * T * H             # stacked polarity score matmul
             + 2 * B * T * T * H                 # (A_pos - A_neg) @ V
             + 2 * rows_total * H * H            # out projection
             + 12 * rows_total * H)              # LN / relu / adds
    transcendentals = 2 * B * T * T + 3 * rows_total
    bytes_accessed = (2 * rows_total * H * 4                 # features in + out (f32)
                      + (H * 3 * H + H * H) * 2              # bf16 weights
                      + (3 * H + H + 2 * H) * 4)             # biases + LN affine (f32)

    # --- generation-aware VMEM budget ---------------------------------------
    feat_block_bytes = Bb * T * H * 4
    weight_bytes = (H * 3 * H + H * H) * 2 + (3 * H + H + 2 * H) * 4
    weight_factor = 1 if single_buffer_consts else 2
    interm_bytes = (Bb * T * 3 * H * 4            # qkv
                    + 2 * Bb * T * T * 4          # stacked scores / probs
                    + 4 * Bb * T * H * 4)         # xn / attn_out / out2 / y
    vmem_needed = (2 * 2 * feat_block_bytes       # double-buffered in + out blocks
                   + weight_factor * weight_bytes
                   + interm_bytes)

    capacity = _vmem_capacity_bytes()
    budget = int(capacity * 0.8)   # headroom for Mosaic internal scratch
    # TODO(synk): K/N-tile the QKV / out-proj weights over an extra "arbitrary"
    # grid axis instead of asserting, so very large H also works on v7x.
    assert vmem_needed <= budget, (
        f"hidden_size={H}: estimated VMEM working set {vmem_needed / 2**20:.1f} MiB "
        f"exceeds ~80% of physical VMEM ({budget / 2**20:.1f} MiB); tile the "
        f"projections or reduce batch_block")

    compiler_kwargs = dict(dimension_semantics=("parallel",))
    if vmem_needed > (16 << 20):   # raise the scoped limit only when needed
        compiler_kwargs["vmem_limit_bytes"] = min(
            max(int(1.25 * vmem_needed), 32 << 20), budget)

    kernel = functools.partial(_pola_kernel, T=T, H=H)

    out = pl.pallas_call(
        kernel,
        out_shape=out_shape,
        grid_spec=pltpu.PrefetchScalarGridSpec(
            num_scalar_prefetch=0,
            grid=grid,
            in_specs=[
                pl.BlockSpec(feat_block, feat_map),               # features
                const_spec((H, 3 * H)), const_spec((1, 3 * H)),   # fused QKV w, b
                const_spec((H, H)), const_spec((1, H)),           # out proj w, b
                const_spec((1, H)), const_spec((1, H)),           # LN gamma, beta
            ],
            out_specs=pl.BlockSpec(feat_block, feat_map),
        ),
        compiler_params=pltpu.CompilerParams(**compiler_kwargs),
        cost_estimate=pl.CostEstimate(flops=flops,
                                      transcendentals=transcendentals,
                                      bytes_accessed=bytes_accessed),
    )(x_in, wqkv, bqkv, wo_t, bo, gamma, beta)

    return out.reshape(B, T, H)


# -------------------------- params / reference -------------------------------


def init_params(key, hidden_size):
    ks = jax.random.split(key, 8)
    std = 1.0 / jnp.sqrt(jnp.float32(hidden_size))
    def lin_w(k):
        return jax.random.normal(k, (hidden_size, hidden_size), jnp.float32) * std
    def lin_b(k):
        return jax.random.normal(k, (1, hidden_size), jnp.float32) * std
    return {
        "wq": lin_w(ks[0]), "bq": lin_b(ks[1]),
        "wk": lin_w(ks[2]), "bk": lin_b(ks[3]),
        "wv": lin_w(ks[4]), "bv": lin_b(ks[5]),
        "wo": lin_w(ks[6]), "bo": lin_b(ks[7]),
        "ln_gamma": jnp.ones((1, hidden_size), jnp.float32),
        "ln_beta": jnp.zeros((1, hidden_size), jnp.float32),
    }


def _reference(features, params):
    # Pure-JAX f32 reference mirroring the PyTorch forward exactly.
    x = features
    mean = jnp.mean(x, axis=-1, keepdims=True)
    var = jnp.mean((x - mean) ** 2, axis=-1, keepdims=True)
    xn = (x - mean) / jnp.sqrt(var + LN_EPS)
    xn = xn * params["ln_gamma"][0] + params["ln_beta"][0]
    q = xn @ params["wq"].T + params["bq"][0]
    k = xn @ params["wk"].T + params["bk"][0]
    v = xn @ params["wv"].T + params["bv"][0]
    scale = x.shape[-1] ** -0.5
    a_pos = jax.nn.softmax(jnp.einsum("btd,bsd->bts",
                                      jax.nn.relu(q), jax.nn.relu(k)) * scale, axis=-1)
    a_neg = jax.nn.softmax(jnp.einsum("btd,bsd->bts",
                                      jax.nn.relu(-q), jax.nn.relu(-k)) * scale, axis=-1)
    out = jnp.einsum("bts,bsd->btd", a_pos, v) - jnp.einsum("bts,bsd->btd", a_neg, v)
    out = out @ params["wo"].T + params["bo"][0]
    return xn + out


# --------------------------------- demo ---------------------------------------


if __name__ == "__main__":
    key = jax.random.PRNGKey(0)
    k_x, k_p = jax.random.split(key)

    B, T, H = 4, 8, 32   # batch, num_tasks, hidden_size
    features = jax.random.normal(k_x, (B, T, H), jnp.float32)
    params = init_params(k_p, H)

    def run(**kw):
        return jax.block_until_ready(pola_linear_attention(features, params, **kw))

    try:
        out = run()
    except Exception:
        # Conservative retry: plain (B, T, H) blocks + default double-buffered
        # constants, in case the lane-folding reshape or Buffered(1) single
        # buffering is not supported by the installed jax / Mosaic version.
        out = run(fold_tasks_into_lanes=False, single_buffer_consts=False)

    ref = _reference(features, params)
    assert out.shape == (B, T, H)
    # bf16 MXU operands + approx-reciprocal softmax vs. an exact f32 reference:
    # relative L2 error plus a loose elementwise bound.
    rel_err = jnp.linalg.norm(out - ref) / jnp.linalg.norm(ref)
    assert rel_err < 1e-2, f"relative L2 error too large: {rel_err}"
    assert jnp.allclose(out, ref, atol=3e-2, rtol=3e-2), "elementwise mismatch vs reference"

    print("KERNEL_OK")
</pallas_src>

<mosaic_0001>
module attributes {stable_mosaic.version = 11 : i64} {
  func.func @_pola_kernel(%arg0: i32, %arg1: memref<4x256xf32, #tpu.memory_space<vmem>>, %arg2: memref<32x96xbf16, #tpu.memory_space<vmem>>, %arg3: memref<1x96xf32, #tpu.memory_space<vmem>>, %arg4: memref<32x32xbf16, #tpu.memory_space<vmem>>, %arg5: memref<1x32xf32, #tpu.memory_space<vmem>>, %arg6: memref<1x32xf32, #tpu.memory_space<vmem>>, %arg7: memref<1x32xf32, #tpu.memory_space<vmem>>, %arg8: memref<4x256xf32, #tpu.memory_space<vmem>>) attributes {dimension_semantics = [#tpu.dimension_semantics<parallel>], iteration_bounds = array<i64: 1>, scalar_prefetch = 0 : i64, scratch_operands = 0 : i64, tpu.core_type = #tpu.core_type<tc>, window_params = [{transform_indices = @transform_0, window_bounds = array<i64: 4, 256>}, {pipeline_mode = #tpu.pipeline_mode<synchronous>, transform_indices = @transform_1, window_bounds = array<i64: 32, 96>}, {pipeline_mode = #tpu.pipeline_mode<synchronous>, transform_indices = @transform_2, window_bounds = array<i64: 1, 96>}, {pipeline_mode = #tpu.pipeline_mode<synchronous>, transform_indices = @transform_3, window_bounds = array<i64: 32, 32>}, {pipeline_mode = #tpu.pipeline_mode<synchronous>, transform_indices = @transform_4, window_bounds = array<i64: 1, 32>}, {pipeline_mode = #tpu.pipeline_mode<synchronous>, transform_indices = @transform_5, window_bounds = array<i64: 1, 32>}, {pipeline_mode = #tpu.pipeline_mode<synchronous>, transform_indices = @transform_6, window_bounds = array<i64: 1, 32>}, {transform_indices = @transform_7, window_bounds = array<i64: 4, 256>}]} {
    %cst = arith.constant 3.200000e+01 : f32
    %cst_0 = arith.constant -5.000000e-01 : f32
    %0 = math.powf %cst, %cst_0 : f32
    %c0 = arith.constant 0 : index
    %c0_1 = arith.constant 0 : index
    %1 = vector.load %arg1[%c0, %c0_1] : memref<4x256xf32, #tpu.memory_space<vmem>>, vector<4x256xf32>
    %2 = vector.shape_cast %1 : vector<4x256xf32> to vector<32x32xf32>
    %cst_2 = arith.constant dense<0.000000e+00> : vector<32xf32>
    %3 = vector.multi_reduction <add>, %2, %cst_2 [1] : vector<32x32xf32> to vector<32xf32>
    %4 = vector.shape_cast %3 : vector<32xf32> to vector<32x1xf32>
    %cst_3 = arith.constant 3.200000e+01 : f32
    %5 = vector.broadcast %cst_3 : f32 to vector<32x1xf32>
    %6 = arith.divf %4, %5 : vector<32x1xf32>
    %7 = vector.broadcast %6 : vector<32x1xf32> to vector<32x32xf32>
    %8 = arith.subf %2, %7 : vector<32x32xf32>
    %9 = arith.mulf %8, %8 : vector<32x32xf32>
    %cst_4 = arith.constant dense<0.000000e+00> : vector<32xf32>
    %10 = vector.multi_reduction <add>, %9, %cst_4 [1] : vector<32x32xf32> to vector<32xf32>
    %11 = vector.shape_cast %10 : vector<32xf32> to vector<32x1xf32>
    %cst_5 = arith.constant 3.200000e+01 : f32
    %12 = vector.broadcast %cst_5 : f32 to vector<32x1xf32>
    %13 = arith.divf %11, %12 : vector<32x1xf32>
    %14 = vector.broadcast %6 : vector<32x1xf32> to vector<32x32xf32>
    %15 = arith.subf %2, %14 : vector<32x32xf32>
    %cst_6 = arith.constant 9.99999974E-6 : f32
    %16 = vector.broadcast %cst_6 : f32 to vector<32x1xf32>
    %17 = arith.addf %13, %16 : vector<32x1xf32>
    %18 = math.rsqrt %17 : vector<32x1xf32>
    %19 = vector.broadcast %18 : vector<32x1xf32> to vector<32x32xf32>
    %20 = arith.mulf %15, %19 : vector<32x32xf32>
    %c0_7 = arith.constant 0 : index
    %c0_8 = arith.constant 0 : index
    %21 = vector.load %arg6[%c0_7, %c0_8] : memref<1x32xf32, #tpu.memory_space<vmem>>, vector<1x32xf32>
    %22 = vector.broadcast %21 : vector<1x32xf32> to vector<32x32xf32>
    %23 = arith.mulf %20, %22 : vector<32x32xf32>
    %c0_9 = arith.constant 0 : index
    %c0_10 = arith.constant 0 : index
    %24 = vector.load %arg7[%c0_9, %c0_10] : memref<1x32xf32, #tpu.memory_space<vmem>>, vector<1x32xf32>
    %25 = vector.broadcast %24 : vector<1x32xf32> to vector<32x32xf32>
    %26 = arith.addf %23, %25 : vector<32x32xf32>
    %27 = arith.truncf %26 : vector<32x32xf32> to vector<32x32xbf16>
    %c0_11 = arith.constant 0 : index
    %c0_12 = arith.constant 0 : index
    %28 = vector.load %arg2[%c0_11, %c0_12] : memref<32x96xbf16, #tpu.memory_space<vmem>>, vector<32x96xbf16>
    %cst_13 = arith.constant dense<0.000000e+00> : vector<32x96xf32>
    %29 = tpu.matmul %27, %28, %cst_13 {dimension_numbers = #tpu.dot_dimension_numbers<[1], [0], [0], [1], [0, 0, 1, 1], [], []>} : vector<32x32xbf16>, vector<32x96xbf16>, vector<32x96xf32> -> vector<32x96xf32>
    %c0_14 = arith.constant 0 : index
    %c0_15 = arith.constant 0 : index
    %30 = vector.load %arg3[%c0_14, %c0_15] : memref<1x96xf32, #tpu.memory_space<vmem>>, vector<1x96xf32>
    %31 = vector.broadcast %30 : vector<1x96xf32> to vector<32x96xf32>
    %32 = arith.addf %29, %31 : vector<32x96xf32>
    %33 = vector.extract_strided_slice %32 {offsets = [0, 0], sizes = [32, 32], strides = [1, 1]} : vector<32x96xf32> to vector<32x32xf32>
    %34 = vector.extract_strided_slice %32 {offsets = [0, 32], sizes = [32, 32], strides = [1, 1]} : vector<32x96xf32> to vector<32x32xf32>
    %35 = vector.extract_strided_slice %32 {offsets = [0, 64], sizes = [32, 32], strides = [1, 1]} : vector<32x96xf32> to vector<32x32xf32>
    %36 = vector.shape_cast %35 : vector<32x32xf32> to vector<4x8x32xf32>
    %cst_16 = arith.constant 0.000000e+00 : f32
    %37 = vector.broadcast %cst_16 : f32 to vector<32x32xf32>
    %38 = arith.maximumf %33, %37 : vector<32x32xf32>
    %cst_17 = arith.constant 0.000000e+00 : f32
    %39 = vector.broadcast %cst_17 : f32 to vector<32x32xf32>
    %40 = arith.maximumf %34, %39 : vector<32x32xf32>
    %41 = arith.subf %38, %33 : vector<32x32xf32>
    %42 = arith.subf %40, %34 : vector<32x32xf32>
    %43 = vector.shape_cast %38 : vector<32x32xf32> to vector<4x8x32xf32>
    %44 = vector.shape_cast %41 : vector<32x32xf32> to vector<4x8x32xf32>
    %45 = tpu.concatenate %43, %44 in 0 : vector<4x8x32xf32>, vector<4x8x32xf32> -> vector<8x8x32xf32>
    %46 = vector.shape_cast %40 : vector<32x32xf32> to vector<4x8x32xf32>
    %47 = vector.shape_cast %42 : vector<32x32xf32> to vector<4x8x32xf32>
    %48 = tpu.concatenate %46, %47 in 0 : vector<4x8x32xf32>, vector<4x8x32xf32> -> vector<8x8x32xf32>
    %49 = arith.truncf %45 : vector<8x8x32xf32> to vector<8x8x32xbf16>
    %50 = arith.truncf %48 : vector<8x8x32xf32> to vector<8x8x32xbf16>
    "tpu.trace_start"() <{level = 10 : i32, message = "bqd,bkd->bqk"}> : () -> ()
    %cst_18 = arith.constant dense<0.000000e+00> : vector<8x8x8xf32>
    %51 = tpu.matmul %49, %50, %cst_18 {dimension_numbers = #tpu.dot_dimension_numbers<[2], [2], [1], [1], [0, 0, 0, 1, 1, 1], [0], [0]>} : vector<8x8x32xbf16>, vector<8x8x32xbf16>, vector<8x8x8xf32> -> vector<8x8x8xf32>
    "tpu.trace_stop"() : () -> ()
    %52 = vector.broadcast %0 : f32 to vector<8x8x8xf32>
    %53 = arith.mulf %51, %52 : vector<8x8x8xf32>
    %cst_19 = arith.constant dense<0xFF800000> : vector<8x8xf32>
    %54 = vector.multi_reduction <maximumf>, %53, %cst_19 [2] : vector<8x8x8xf32> to vector<8x8xf32>
    %55 = vector.shape_cast %54 : vector<8x8xf32> to vector<8x8x1xf32>
    %56 = vector.broadcast %55 : vector<8x8x1xf32> to vector<8x8x8xf32>
    %57 = arith.subf %53, %56 : vector<8x8x8xf32>
    %58 = math.exp %57 : vector<8x8x8xf32>
    %cst_20 = arith.constant dense<0.000000e+00> : vector<8x8xf32>
    %59 = vector.multi_reduction <add>, %58, %cst_20 [2] : vector<8x8x8xf32> to vector<8x8xf32>
    %60 = vector.shape_cast %59 : vector<8x8xf32> to vector<8x8x1xf32>
    %61 = tpu.reciprocal %60 {approx = true} : vector<8x8x1xf32> -> vector<8x8x1xf32>
    %62 = vector.broadcast %61 : vector<8x8x1xf32> to vector<8x8x8xf32>
    %63 = arith.mulf %58, %62 : vector<8x8x8xf32>
    %64 = vector.extract_strided_slice %63 {offsets = [0, 0, 0], sizes = [4, 8, 8], strides = [1, 1, 1]} : vector<8x8x8xf32> to vector<4x8x8xf32>
    %65 = vector.extract_strided_slice %63 {offsets = [4, 0, 0], sizes = [4, 8, 8], strides = [1, 1, 1]} : vector<8x8x8xf32> to vector<4x8x8xf32>
    %66 = arith.subf %64, %65 : vector<4x8x8xf32>
    %67 = arith.truncf %66 : vector<4x8x8xf32> to vector<4x8x8xbf16>
    %68 = arith.truncf %36 : vector<4x8x32xf32> to vector<4x8x32xbf16>
    "tpu.trace_start"() <{level = 10 : i32, message = "bqk,bkd->bqd"}> : () -> ()
    %cst_21 = arith.constant dense<0.000000e+00> : vector<4x8x32xf32>
    %69 = tpu.matmul %67, %68, %cst_21 {dimension_numbers = #tpu.dot_dimension_numbers<[2], [1], [1], [2], [0, 0, 0, 1, 1, 2], [0], [0]>} : vector<4x8x8xbf16>, vector<4x8x32xbf16>, vector<4x8x32xf32> -> vector<4x8x32xf32>
    "tpu.trace_stop"() : () -> ()
    %70 = vector.shape_cast %69 : vector<4x8x32xf32> to vector<32x32xf32>
    %71 = arith.truncf %70 : vector<32x32xf32> to vector<32x32xbf16>
    %c0_22 = arith.constant 0 : index
    %c0_23 = arith.constant 0 : index
    %72 = vector.load %arg4[%c0_22, %c0_23] : memref<32x32xbf16, #tpu.memory_space<vmem>>, vector<32x32xbf16>
    %cst_24 = arith.constant dense<0.000000e+00> : vector<32x32xf32>
    %73 = tpu.matmul %71, %72, %cst_24 {dimension_numbers = #tpu.dot_dimension_numbers<[1], [0], [0], [1], [0, 0, 1, 1], [], []>} : vector<32x32xbf16>, vector<32x32xbf16>, vector<32x32xf32> -> vector<32x32xf32>
    %c0_25 = arith.constant 0 : index
    %c0_26 = arith.constant 0 : index
    %74 = vector.load %arg5[%c0_25, %c0_26] : memref<1x32xf32, #tpu.memory_space<vmem>>, vector<1x32xf32>
    %75 = vector.broadcast %74 : vector<1x32xf32> to vector<32x32xf32>
    %76 = arith.addf %73, %75 : vector<32x32xf32>
    %77 = arith.addf %26, %76 : vector<32x32xf32>
    %78 = vector.shape_cast %77 : vector<32x32xf32> to vector<4x256xf32>
    %c0_27 = arith.constant 0 : index
    %c0_28 = arith.constant 0 : index
    %79 = vector.load %arg8[%c0_27, %c0_28] : memref<4x256xf32, #tpu.memory_space<vmem>>, vector<4x256xf32>
    tpu.vector_store %arg8[%c0_27, %c0_28], %78 {strides = array<i32>} : memref<4x256xf32, #tpu.memory_space<vmem>>, vector<4x256xf32>,
    return
  }
  func.func @transform_0(%arg0: i32) -> (i32, i32) {
    %c0_i32 = arith.constant 0 : i32
    %c0_i32_0 = arith.constant 0 : i32
    return %arg0, %c0_i32 : i32, i32
  }
  func.func @transform_1(%arg0: i32) -> (i32, i32) {
    %c0_i32 = arith.constant 0 : i32
    %c0_i32_0 = arith.constant 0 : i32
    %c0_i32_1 = arith.constant 0 : i32
    return %c0_i32, %c0_i32_0 : i32, i32
  }
  func.func @transform_2(%arg0: i32) -> (i32, i32) {
    %c0_i32 = arith.constant 0 : i32
    %c0_i32_0 = arith.constant 0 : i32
    %c0_i32_1 = arith.constant 0 : i32
    return %c0_i32, %c0_i32_0 : i32, i32
  }
  func.func @transform_3(%arg0: i32) -> (i32, i32) {
    %c0_i32 = arith.constant 0 : i32
    %c0_i32_0 = arith.constant 0 : i32
    %c0_i32_1 = arith.constant 0 : i32
    return %c0_i32, %c0_i32_0 : i32, i32
  }
  func.func @transform_4(%arg0: i32) -> (i32, i32) {
    %c0_i32 = arith.constant 0 : i32
    %c0_i32_0 = arith.constant 0 : i32
    %c0_i32_1 = arith.constant 0 : i32
    return %c0_i32, %c0_i32_0 : i32, i32
  }
  func.func @transform_5(%arg0: i32) -> (i32, i32) {
    %c0_i32 = arith.constant 0 : i32
    %c0_i32_0 = arith.constant 0 : i32
    %c0_i32_1 = arith.constant 0 : i32
    return %c0_i32, %c0_i32_0 : i32, i32
  }
  func.func @transform_6(%arg0: i32) -> (i32, i32) {
    %c0_i32 = arith.constant 0 : i32
    %c0_i32_0 = arith.constant 0 : i32
    %c0_i32_1 = arith.constant 0 : i32
    return %c0_i32, %c0_i32_0 : i32, i32
  }
  func.func @transform_7(%arg0: i32) -> (i32, i32) {
    %c0_i32 = arith.constant 0 : i32
    %c0_i32_0 = arith.constant 0 : i32
    return %arg0, %c0_i32 : i32, i32
  }
}

module attributes {stable_mosaic.version = 11 : i64} {
  func.func @_pola_kernel(%arg0: i32, %arg1: memref<4x8x32xf32, #tpu.memory_space<vmem>>, %arg2: memref<32x96xbf16, #tpu.memory_space<vmem>>, %arg3: memref<1x96xf32, #tpu.memory_space<vmem>>, %arg4: memref<32x32xbf16, #tpu.memory_space<vmem>>, %arg5: memref<1x32xf32, #tpu.memory_space<vmem>>, %arg6: memref<1x32xf32, #tpu.memory_space<vmem>>, %arg7: memref<1x32xf32, #tpu.memory_space<vmem>>, %arg8: memref<4x8x32xf32, #tpu.memory_space<vmem>>) attributes {dimension_semantics = [#tpu.dimension_semantics<parallel>], iteration_bounds = array<i64: 1>, scalar_prefetch = 0 : i64, scratch_operands = 0 : i64, tpu.core_type = #tpu.core_type<tc>, window_params = [{transform_indices = @transform_0, window_bounds = array<i64: 4, 8, 32>}, {pipeline_mode = #tpu.pipeline_mode<synchronous>, transform_indices = @transform_1, window_bounds = array<i64: 32, 96>}, {pipeline_mode = #tpu.pipeline_mode<synchronous>, transform_indices = @transform_2, window_bounds = array<i64: 1, 96>}, {pipeline_mode = #tpu.pipeline_mode<synchronous>, transform_indices = @transform_3, window_bounds = array<i64: 32, 32>}, {pipeline_mode = #tpu.pipeline_mode<synchronous>, transform_indices = @transform_4, window_bounds = array<i64: 1, 32>}, {pipeline_mode = #tpu.pipeline_mode<synchronous>, transform_indices = @transform_5, window_bounds = array<i64: 1, 32>}, {pipeline_mode = #tpu.pipeline_mode<synchronous>, transform_indices = @transform_6, window_bounds = array<i64: 1, 32>}, {transform_indices = @transform_7, window_bounds = array<i64: 4, 8, 32>}]} {
    %cst = arith.constant 3.200000e+01 : f32
    %cst_0 = arith.constant -5.000000e-01 : f32
    %0 = math.powf %cst, %cst_0 : f32
    %c0 = arith.constant 0 : index
    %c0_1 = arith.constant 0 : index
    %c0_2 = arith.constant 0 : index
    %1 = vector.load %arg1[%c0, %c0_1, %c0_2] : memref<4x8x32xf32, #tpu.memory_space<vmem>>, vector<4x8x32xf32>
    %2 = vector.shape_cast %1 : vector<4x8x32xf32> to vector<32x32xf32>
    %cst_3 = arith.constant dense<0.000000e+00> : vector<32xf32>
    %3 = vector.multi_reduction <add>, %2, %cst_3 [1] : vector<32x32xf32> to vector<32xf32>
    %4 = vector.shape_cast %3 : vector<32xf32> to vector<32x1xf32>
    %cst_4 = arith.constant 3.200000e+01 : f32
    %5 = vector.broadcast %cst_4 : f32 to vector<32x1xf32>
    %6 = arith.divf %4, %5 : vector<32x1xf32>
    %7 = vector.broadcast %6 : vector<32x1xf32> to vector<32x32xf32>
    %8 = arith.subf %2, %7 : vector<32x32xf32>
    %9 = arith.mulf %8, %8 : vector<32x32xf32>
    %cst_5 = arith.constant dense<0.000000e+00> : vector<32xf32>
    %10 = vector.multi_reduction <add>, %9, %cst_5 [1] : vector<32x32xf32> to vector<32xf32>
    %11 = vector.shape_cast %10 : vector<32xf32> to vector<32x1xf32>
    %cst_6 = arith.constant 3.200000e+01 : f32
    %12 = vector.broadcast %cst_6 : f32 to vector<32x1xf32>
    %13 = arith.divf %11, %12 : vector<32x1xf32>
    %14 = vector.broadcast %6 : vector<32x1xf32> to vector<32x32xf32>
    %15 = arith.subf %2, %14 : vector<32x32xf32>
    %cst_7 = arith.constant 9.99999974E-6 : f32
    %16 = vector.broadcast %cst_7 : f32 to vector<32x1xf32>
    %17 = arith.addf %13, %16 : vector<32x1xf32>
    %18 = math.rsqrt %17 : vector<32x1xf32>
    %19 = vector.broadcast %18 : vector<32x1xf32> to vector<32x32xf32>
    %20 = arith.mulf %15, %19 : vector<32x32xf32>
    %c0_8 = arith.constant 0 : index
    %c0_9 = arith.constant 0 : index
    %21 = vector.load %arg6[%c0_8, %c0_9] : memref<1x32xf32, #tpu.memory_space<vmem>>, vector<1x32xf32>
    %22 = vector.broadcast %21 : vector<1x32xf32> to vector<32x32xf32>
    %23 = arith.mulf %20, %22 : vector<32x32xf32>
    %c0_10 = arith.constant 0 : index
    %c0_11 = arith.constant 0 : index
    %24 = vector.load %arg7[%c0_10, %c0_11] : memref<1x32xf32, #tpu.memory_space<vmem>>, vector<1x32xf32>
    %25 = vector.broadcast %24 : vector<1x32xf32> to vector<32x32xf32>
    %26 = arith.addf %23, %25 : vector<32x32xf32>
    %27 = arith.truncf %26 : vector<32x32xf32> to vector<32x32xbf16>
    %c0_12 = arith.constant 0 : index
    %c0_13 = arith.constant 0 : index
    %28 = vector.load %arg2[%c0_12, %c0_13] : memref<32x96xbf16, #tpu.memory_space<vmem>>, vector<32x96xbf16>
    %cst_14 = arith.constant dense<0.000000e+00> : vector<32x96xf32>
    %29 = tpu.matmul %27, %28, %cst_14 {dimension_numbers = #tpu.dot_dimension_numbers<[1], [0], [0], [1], [0, 0, 1, 1], [], []>} : vector<32x32xbf16>, vector<32x96xbf16>, vector<32x96xf32> -> vector<32x96xf32>
    %c0_15 = arith.constant 0 : index
    %c0_16 = arith.constant 0 : index
    %30 = vector.load %arg3[%c0_15, %c0_16] : memref<1x96xf32, #tpu.memory_space<vmem>>, vector<1x96xf32>
    %31 = vector.broadcast %30 : vector<1x96xf32> to vector<32x96xf32>
    %32 = arith.addf %29, %31 : vector<32x96xf32>
    %33 = vector.extract_strided_slice %32 {offsets = [0, 0], sizes = [32, 32], strides = [1, 1]} : vector<32x96xf32> to vector<32x32xf32>
    %34 = vector.extract_strided_slice %32 {offsets = [0, 32], sizes = [32, 32], strides = [1, 1]} : vector<32x96xf32> to vector<32x32xf32>
    %35 = vector.extract_strided_slice %32 {offsets = [0, 64], sizes = [32, 32], strides = [1, 1]} : vector<32x96xf32> to vector<32x32xf32>
    %36 = vector.shape_cast %35 : vector<32x32xf32> to vector<4x8x32xf32>
    %cst_17 = arith.constant 0.000000e+00 : f32
    %37 = vector.broadcast %cst_17 : f32 to vector<32x32xf32>
    %38 = arith.maximumf %33, %37 : vector<32x32xf32>
    %cst_18 = arith.constant 0.000000e+00 : f32
    %39 = vector.broadcast %cst_18 : f32 to vector<32x32xf32>
    %40 = arith.maximumf %34, %39 : vector<32x32xf32>
    %41 = arith.subf %38, %33 : vector<32x32xf32>
    %42 = arith.subf %40, %34 : vector<32x32xf32>
    %43 = vector.shape_cast %38 : vector<32x32xf32> to vector<4x8x32xf32>
    %44 = vector.shape_cast %41 : vector<32x32xf32> to vector<4x8x32xf32>
    %45 = tpu.concatenate %43, %44 in 0 : vector<4x8x32xf32>, vector<4x8x32xf32> -> vector<8x8x32xf32>
    %46 = vector.shape_cast %40 : vector<32x32xf32> to vector<4x8x32xf32>
    %47 = vector.shape_cast %42 : vector<32x32xf32> to vector<4x8x32xf32>
    %48 = tpu.concatenate %46, %47 in 0 : vector<4x8x32xf32>, vector<4x8x32xf32> -> vector<8x8x32xf32>
    %49 = arith.truncf %45 : vector<8x8x32xf32> to vector<8x8x32xbf16>
    %50 = arith.truncf %48 : vector<8x8x32xf32> to vector<8x8x32xbf16>
    "tpu.trace_start"() <{level = 10 : i32, message = "bqd,bkd->bqk"}> : () -> ()
    %cst_19 = arith.constant dense<0.000000e+00> : vector<8x8x8xf32>
    %51 = tpu.matmul %49, %50, %cst_19 {dimension_numbers = #tpu.dot_dimension_numbers<[2], [2], [1], [1], [0, 0, 0, 1, 1, 1], [0], [0]>} : vector<8x8x32xbf16>, vector<8x8x32xbf16>, vector<8x8x8xf32> -> vector<8x8x8xf32>
    "tpu.trace_stop"() : () -> ()
    %52 = vector.broadcast %0 : f32 to vector<8x8x8xf32>
    %53 = arith.mulf %51, %52 : vector<8x8x8xf32>
    %cst_20 = arith.constant dense<0xFF800000> : vector<8x8xf32>
    %54 = vector.multi_reduction <maximumf>, %53, %cst_20 [2] : vector<8x8x8xf32> to vector<8x8xf32>
    %55 = vector.shape_cast %54 : vector<8x8xf32> to vector<8x8x1xf32>
    %56 = vector.broadcast %55 : vector<8x8x1xf32> to vector<8x8x8xf32>
    %57 = arith.subf %53, %56 : vector<8x8x8xf32>
    %58 = math.exp %57 : vector<8x8x8xf32>
    %cst_21 = arith.constant dense<0.000000e+00> : vector<8x8xf32>
    %59 = vector.multi_reduction <add>, %58, %cst_21 [2] : vector<8x8x8xf32> to vector<8x8xf32>
    %60 = vector.shape_cast %59 : vector<8x8xf32> to vector<8x8x1xf32>
    %61 = tpu.reciprocal %60 {approx = true} : vector<8x8x1xf32> -> vector<8x8x1xf32>
    %62 = vector.broadcast %61 : vector<8x8x1xf32> to vector<8x8x8xf32>
    %63 = arith.mulf %58, %62 : vector<8x8x8xf32>
    %64 = vector.extract_strided_slice %63 {offsets = [0, 0, 0], sizes = [4, 8, 8], strides = [1, 1, 1]} : vector<8x8x8xf32> to vector<4x8x8xf32>
    %65 = vector.extract_strided_slice %63 {offsets = [4, 0, 0], sizes = [4, 8, 8], strides = [1, 1, 1]} : vector<8x8x8xf32> to vector<4x8x8xf32>
    %66 = arith.subf %64, %65 : vector<4x8x8xf32>
    %67 = arith.truncf %66 : vector<4x8x8xf32> to vector<4x8x8xbf16>
    %68 = arith.truncf %36 : vector<4x8x32xf32> to vector<4x8x32xbf16>
    "tpu.trace_start"() <{level = 10 : i32, message = "bqk,bkd->bqd"}> : () -> ()
    %cst_22 = arith.constant dense<0.000000e+00> : vector<4x8x32xf32>
    %69 = tpu.matmul %67, %68, %cst_22 {dimension_numbers = #tpu.dot_dimension_numbers<[2], [1], [1], [2], [0, 0, 0, 1, 1, 2], [0], [0]>} : vector<4x8x8xbf16>, vector<4x8x32xbf16>, vector<4x8x32xf32> -> vector<4x8x32xf32>
    "tpu.trace_stop"() : () -> ()
    %70 = vector.shape_cast %69 : vector<4x8x32xf32> to vector<32x32xf32>
    %71 = arith.truncf %70 : vector<32x32xf32> to vector<32x32xbf16>
    %c0_23 = arith.constant 0 : index
    %c0_24 = arith.constant 0 : index
    %72 = vector.load %arg4[%c0_23, %c0_24] : memref<32x32xbf16, #tpu.memory_space<vmem>>, vector<32x32xbf16>
    %cst_25 = arith.constant dense<0.000000e+00> : vector<32x32xf32>
    %73 = tpu.matmul %71, %72, %cst_25 {dimension_numbers = #tpu.dot_dimension_numbers<[1], [0], [0], [1], [0, 0, 1, 1], [], []>} : vector<32x32xbf16>, vector<32x32xbf16>, vector<32x32xf32> -> vector<32x32xf32>
    %c0_26 = arith.constant 0 : index
    %c0_27 = arith.constant 0 : index
    %74 = vector.load %arg5[%c0_26, %c0_27] : memref<1x32xf32, #tpu.memory_space<vmem>>, vector<1x32xf32>
    %75 = vector.broadcast %74 : vector<1x32xf32> to vector<32x32xf32>
    %76 = arith.addf %73, %75 : vector<32x32xf32>
    %77 = arith.addf %26, %76 : vector<32x32xf32>
    %78 = vector.shape_cast %77 : vector<32x32xf32> to vector<4x8x32xf32>
    %c0_28 = arith.constant 0 : index
    %c0_29 = arith.constant 0 : index
    %c0_30 = arith.constant 0 : index
    %79 = vector.load %arg8[%c0_28, %c0_29, %c0_30] : memref<4x8x32xf32, #tpu.memory_space<vmem>>, vector<4x8x32xf32>
    tpu.vector_store %arg8[%c0_28, %c0_29, %c0_30], %78 {strides = array<i32>} : memref<4x8x32xf32, #tpu.memory_space<vmem>>, vector<4x8x32xf32>,
    return
  }
  func.func @transform_0(%arg0: i32) -> (i32, i32, i32) {
    %c0_i32 = arith.constant 0 : i32
    %c0_i32_0 = arith.constant 0 : i32
    %c0_i32_1 = arith.constant 0 : i32
    return %arg0, %c0_i32, %c0_i32_0 : i32, i32, i32
  }
  func.func @transform_1(%arg0: i32) -> (i32, i32) {
    %c0_i32 = arith.constant 0 : i32
    %c0_i32_0 = arith.constant 0 : i32
    %c0_i32_1 = arith.constant 0 : i32
    return %c0_i32, %c0_i32_0 : i32, i32
  }
  func.func @transform_2(%arg0: i32) -> (i32, i32) {
    %c0_i32 = arith.constant 0 : i32
    %c0_i32_0 = arith.constant 0 : i32
    %c0_i32_1 = arith.constant 0 : i32
    return %c0_i32, %c0_i32_0 : i32, i32
  }
  func.func @transform_3(%arg0: i32) -> (i32, i32) {
    %c0_i32 = arith.constant 0 : i32
    %c0_i32_0 = arith.constant 0 : i32
    %c0_i32_1 = arith.constant 0 : i32
    return %c0_i32, %c0_i32_0 : i32, i32
  }
  func.func @transform_4(%arg0: i32) -> (i32, i32) {
    %c0_i32 = arith.constant 0 : i32
    %c0_i32_0 = arith.constant 0 : i32
    %c0_i32_1 = arith.constant 0 : i32
    return %c0_i32, %c0_i32_0 : i32, i32
  }
  func.func @transform_5(%arg0: i32) -> (i32, i32) {
    %c0_i32 = arith.constant 0 : i32
    %c0_i32_0 = arith.constant 0 : i32
    %c0_i32_1 = arith.constant 0 : i32
    return %c0_i32, %c0_i32_0 : i32, i32
  }
  func.func @transform_6(%arg0: i32) -> (i32, i32) {
    %c0_i32 = arith.constant 0 : i32
    %c0_i32_0 = arith.constant 0 : i32
    %c0_i32_1 = arith.constant 0 : i32
    return %c0_i32, %c0_i32_0 : i32, i32
  }
  func.func @transform_7(%arg0: i32) -> (i32, i32, i32) {
    %c0_i32 = arith.constant 0 : i32
    %c0_i32_0 = arith.constant 0 : i32
    %c0_i32_1 = arith.constant 0 : i32
    return %arg0, %c0_i32, %c0_i32_0 : i32, i32, i32
  }
}

</mosaic_0001>

<llo_original>
// kernel: tpu_custom_call.1
$region0: #{tpu_custom_call.1}
  #allocation0 [shape = 'u32[]', space=smem, size = 0x4, offset = 0x4, fixed_abs, tag = 'smem constant byte address 0x4 - core index']
  #allocation1 [shape = 'u32[144,128]{1,0:T(1,128)}', space=vmem, size = 0x12000, scoped, tag = 'internal scratch']
  %s0 = inlined_call_operand.hbm [shape: f32[4,8,32], index: 0, kind: input, shape index: {}]
  %s1 = inlined_call_operand.hbm [shape: bf16[32,96], index: 1, kind: input, shape index: {}]
  %s2 = inlined_call_operand.vmem [shape: f32[1,96], index: 2, kind: input, shape index: {}]
  %s3 = inlined_call_operand.hbm [shape: bf16[32,32], index: 3, kind: input, shape index: {}]
  %s4 = inlined_call_operand.vmem [shape: f32[1,32], index: 4, kind: input, shape index: {}]
  %s5 = inlined_call_operand.vmem [shape: f32[1,32], index: 5, kind: input, shape index: {}]
  %s6 = inlined_call_operand.vmem [shape: f32[1,32], index: 6, kind: input, shape index: {}]
  %s7 = inlined_call_operand.hbm [shape: f32[4,8,32], index: 7, kind: output, shape index: {}]
  %s8 = sld [smem:[#allocation0]]
  $region50: #{tpu_custom_call.1} parent=0
    _
  %s10 = ssub.s32 1, %s8
  %s11 = scalar_select 0, %s10, %s8
  $region1: #{tpu_custom_call.1} parent=0
    #allocation2 [shape = 'u8[16384]{0}', space=vmem, size = 0x4000, scoped, tag = 'input window, operand 0, single buffered']
    #allocation3 [shape = 's32[1]{0}', space=sflag, size = 0x4, scoped, tag = 'scoped memory for tpu_custom_call.1']
    #allocation4 [shape = 's32[1]{0}', space=sflag, size = 0x4, scoped, tag = 'scoped memory for tpu_custom_call.1']
    #allocation5 [shape = 'u8[8192]{0}', space=vmem, size = 0x2000, scoped, tag = 'input window, operand 1, single buffered']
    #allocation6 [shape = 's32[1]{0}', space=sflag, size = 0x4, scoped, tag = 'scoped memory for tpu_custom_call.1']
    #allocation7 [shape = 'u8[8192]{0}', space=vmem, size = 0x2000, scoped, tag = 'input window, operand 3, single buffered']
    #allocation8 [shape = 'u8[16384]{0}', space=vmem, size = 0x4000, scoped, tag = 'output window, operand 0, single buffered']
    %12 = vsyncpa [#allocation3], 0
    %13 = vsyncpa [#allocation6], 0
    %14 = vsyncpa [#allocation4], 0
    // Predicated region
    $region2: #{tpu_custom_call.1} parent=1 // pred_check
      _
    $region3: #{tpu_custom_call.1} parent=1 // pred_check_branch
      %16 = sbr.rel (0) target = $region5
    $region4: #{tpu_custom_call.1} parent=1 // pred_region
      %s18 = ssub.s32 512, 512
      %19 = vsyncadd [#allocation3], %s18
      %s20 = sshll.u32 [#allocation2], 4
      %s21 = int_to_ptr.vmem [resolvable:$true] %s20
      %26 = dma.hbm_to_vmem [thread:$0]  %s0, 512, %s21, [#allocation3], 128, 128, 8
    $region5: #{tpu_custom_call.1} parent=1 // pred_fallthru
      _
    // Predicated region
    $region6: #{tpu_custom_call.1} parent=1 // pred_check
      _
    $region7: #{tpu_custom_call.1} parent=1 // pred_check_branch
      %28 = sbr.rel (0) target = $region9
    $region8: #{tpu_custom_call.1} parent=1 // pred_region
      %s30 = ssub.s32 256, 256
      %31 = vsyncadd [#allocation6], %s30
      %s32 = sshll.u32 [#allocation5], 4
      %s33 = int_to_ptr.vmem [resolvable:$true] %s32
      %38 = dma.hbm_to_vmem [thread:$0]  %s1, 256, %s33, [#allocation6], 64, 64, 4
    $region9: #{tpu_custom_call.1} parent=1 // pred_fallthru
      _
    // Predicated region
    $region10: #{tpu_custom_call.1} parent=1 // pred_check
      _
    $region11: #{tpu_custom_call.1} parent=1 // pred_check_branch
      %40 = sbr.rel (0) target = $region13
    $region12: #{tpu_custom_call.1} parent=1 // pred_region
      _
    $region13: #{tpu_custom_call.1} parent=1 // pred_fallthru
      _
    // Predicated region
    $region14: #{tpu_custom_call.1} parent=1 // pred_check
      _
    $region15: #{tpu_custom_call.1} parent=1 // pred_check_branch
      %42 = sbr.rel (0) target = $region17
    $region16: #{tpu_custom_call.1} parent=1 // pred_region
      %s44 = ssub.s32 256, 256
      %45 = vsyncadd [#allocation6], %s44
      %s46 = sshll.u32 [#allocation7], 4
      %s47 = int_to_ptr.vmem [resolvable:$true] %s46
      %52 = dma.hbm_to_vmem [thread:$0]  %s3, 256, %s47, [#allocation6], 64, 64, 4
    $region17: #{tpu_custom_call.1} parent=1 // pred_fallthru
      _
    // Predicated region
    $region18: #{tpu_custom_call.1} parent=1 // pred_check
      _
    $region19: #{tpu_custom_call.1} parent=1 // pred_check_branch
      %54 = sbr.rel (0) target = $region21
    $region20: #{tpu_custom_call.1} parent=1 // pred_region
      _
    $region21: #{tpu_custom_call.1} parent=1 // pred_fallthru
      _
    // Predicated region
    $region22: #{tpu_custom_call.1} parent=1 // pred_check
      _
    $region23: #{tpu_custom_call.1} parent=1 // pred_check_branch
      %56 = sbr.rel (0) target = $region25
    $region24: #{tpu_custom_call.1} parent=1 // pred_region
      _
    $region25: #{tpu_custom_call.1} parent=1 // pred_fallthru
      _
    // Predicated region
    $region26: #{tpu_custom_call.1} parent=1 // pred_check
      _
    $region27: #{tpu_custom_call.1} parent=1 // pred_check_branch
      %58 = sbr.rel (0) target = $region29
    $region28: #{tpu_custom_call.1} parent=1 // pred_region
      _
    $region29: #{tpu_custom_call.1} parent=1 // pred_fallthru
      _
    // Predicated region
    $region30: #{tpu_custom_call.1} parent=1 // pred_check
      _
    $region31: #{tpu_custom_call.1} parent=1 // pred_check_branch
      %60 = sbr.rel (0) target = $region33
    $region32: #{tpu_custom_call.1} parent=1 // pred_region
      %61 = dma.done [#allocation3], 512
    $region33: #{tpu_custom_call.1} parent=1 // pred_fallthru
      _
    // Predicated region
    $region34: #{tpu_custom_call.1} parent=1 // pred_check
      _
    $region35: #{tpu_custom_call.1} parent=1 // pred_check_branch
      %63 = sbr.rel (0) target = $region37
    $region36: #{tpu_custom_call.1} parent=1 // pred_region
      %64 = dma.done [#allocation6], 256
    $region37: #{tpu_custom_call.1} parent=1 // pred_fallthru
      _
    // Predicated region
    $region38: #{tpu_custom_call.1} parent=1 // pred_check
      _
    $region39: #{tpu_custom_call.1} parent=1 // pred_check_branch
      %66 = sbr.rel (0) target = $region41
    $region40: #{tpu_custom_call.1} parent=1 // pred_region
      %67 = dma.done [#allocation6], 256
    $region41: #{tpu_custom_call.1} parent=1 // pred_fallthru
      _
    %v69 = vld [vmem:[#allocation2] sm:$0xff]
    %v70 = vld [vmem:[#allocation2 + $0x8] sm:$0xff]
    %v71 = vld [vmem:[#allocation2 + $0x10] sm:$0xff]
    %v72 = vld [vmem:[#allocation2 + $0x18] sm:$0xff]
    %vm73 = vcmask 261120
    %v74 = vsel %vm73, %v69, 0.0
    %75 = vadd.xlane.f32.xlu0 %v74
    %v76 = vpop.xlane.xlu0 %75
    %v77 = vsel %vm73, %v70, 0.0
    %78 = vadd.xlane.f32.xlu0 %v77
    %v79 = vpop.xlane.xlu0 %78
    %v80 = vsel %vm73, %v71, 0.0
    %81 = vadd.xlane.f32.xlu0 %v80
    %v82 = vpop.xlane.xlu0 %81
    %v83 = vsel %vm73, %v72, 0.0
    %84 = vadd.xlane.f32.xlu0 %v83
    %v85 = vpop.xlane.xlu0 %84
    %v86 = vrcp.pop 32.0
    %v87 = vmul.f32 %v76, %v86
    %v88 = vmul.f32 %v79, %v86
    %v89 = vmul.f32 %v82, %v86
    %v90 = vmul.f32 %v85, %v86
    %v91 = vsub.f32 %v69, %v87
    %v92 = vsub.f32 %v70, %v88
    %v93 = vsub.f32 %v71, %v89
    %v94 = vsub.f32 %v72, %v90
    %v95 = vmul.f32 %v91, %v91
    %v96 = vmul.f32 %v92, %v92
    %v97 = vmul.f32 %v93, %v93
    %v98 = vmul.f32 %v94, %v94
    %v99 = vsel %vm73, %v95, 0.0
    %100 = vadd.xlane.f32.xlu0 %v99
    %v101 = vpop.xlane.xlu0 %100
    %v102 = vsel %vm73, %v96, 0.0
    %103 = vadd.xlane.f32.xlu0 %v102
    %v104 = vpop.xlane.xlu0 %103
    %v105 = vsel %vm73, %v97, 0.0
    %106 = vadd.xlane.f32.xlu0 %v105
    %v107 = vpop.xlane.xlu0 %106
    %v108 = vsel %vm73, %v98, 0.0
    %109 = vadd.xlane.f32.xlu0 %v108
    %v110 = vpop.xlane.xlu0 %109
    %v111 = vmul.f32 %v101, %v86
    %v112 = vmul.f32 %v104, %v86
    %v113 = vmul.f32 %v107, %v86
    %v114 = vmul.f32 %v110, %v86
    %v115 = vadd.f32 %v111, 1e-05
    %v116 = vadd.f32 %v112, 1e-05
    %v117 = vadd.f32 %v113, 1e-05
    %v118 = vadd.f32 %v114, 1e-05
    %v119 = vrsqrt.pop %v115
    %v120 = vrsqrt.pop %v116
    %v121 = vrsqrt.pop %v117
    %v122 = vrsqrt.pop %v118
    %v123 = vmul.f32 %v91, %v119
    %v124 = vmul.f32 %v92, %v120
    %v125 = vmul.f32 %v93, %v121
    %v126 = vmul.f32 %v94, %v122
    %v127 = vld [vmem:[%s5] sm:$0x1]
    %v129 = vlaneseq
    %v130 = vshrl.u32 %v129, 7
    %v131 = vsub.s32 0, %v130
    %v132 = vrot.slane %v127, %v131
    %v134 = vmul.f32 %v123, %v132
    %v135 = vmul.f32 %v124, %v132
    %v136 = vmul.f32 %v125, %v132
    %v137 = vmul.f32 %v126, %v132
    %v138 = vld [vmem:[%s6] sm:$0x1]
    %v140 = vlaneseq
    %v141 = vshrl.u32 %v140, 7
    %v142 = vsub.s32 0, %v141
    %v143 = vrot.slane %v138, %v142
    %v145 = vadd.f32 %v134, %v143
    %v146 = vadd.f32 %v135, %v143
    %v147 = vadd.f32 %v136, %v143
    %v148 = vadd.f32 %v137, %v143
    %v149 = vpack.c.bf16 %v146, %v145
    %v150 = vpack.c.bf16 %v148, %v147
    %v151 = vld [vmem:[#allocation5] sm:$0xf]
    %v152 = vld [vmem:[#allocation5 + $0x4] sm:$0xf]
    %v153 = vld [vmem:[#allocation5 + $0x8] sm:$0xf]
    %v154 = vld [vmem:[#allocation5 + $0xc] sm:$0xf]
    %v155 = vld [vmem:[%s2] sm:$0x1]
    %v157 = vlaneseq
    %v158 = vshrl.u32 %v157, 7
    %v159 = vsub.s32 0, %v158
    %v160 = vrot.slane %v155, %v159
    %v166 = vunpack.c.l.b16 %v151
    %v167 = vunpack.c.l.b16 %v152
    %v168 = vunpack.c.l.b16 %v153
    %v169 = vunpack.c.l.b16 %v154
    %v170 = vpack.c.b16 %v167, %v166
    %v171 = vpack.c.b16 %v169, %v168
    %v175 = vsel %vm73, %v149, 0
    %v178 = vsel %vm73, %v150, 0
    %180 = vmatprep.subr.bf16.mxu0 0
    %181 = vmatpush1.bf16.msra.mxu0 0
    %182 = vmatprep.subr.bf16.mxu0 0
    %183 = vmatpush1.bf16.msra.mxu0 0
    %184 = vmatprep.subr.bf16.mxu0 0
    %185 = vmatpush1.bf16.msra.mxu0 0
    %186 = vmatprep.subr.bf16.mxu0 0
    %187 = vmatpush1.bf16.msra.mxu0 0
    %188 = vmatprep.subr.bf16.mxu0 0
    %189 = vmatpush1.bf16.msra.mxu0 0
    %190 = vmatprep.subr.bf16.mxu0 0
    %191 = vmatpush1.bf16.msra.mxu0 0
    %192 = vmatprep.subr.bf16.mxu0 0
    %193 = vmatpush1.bf16.msra.mxu0 %v171
    %194 = vmatprep.subr.bf16.mxu0 0
    %195 = vmatpush1.bf16.msra.mxu0 %v170
    %196 = vmatprep.subr.bf16.mxu0 0
    %197 = vmatpush2.bf16.msra.mxu0 0
    %198 = vmatprep.subr.bf16.mxu0 0
    %199 = vmatpush2.bf16.msra.mxu0 0
    %200 = vmatprep.subr.bf16.mxu0 0
    %201 = vmatpush2.bf16.msra.mxu0 0
    %202 = vmatprep.subr.bf16.mxu0 0
    %203 = vmatpush2.bf16.msra.mxu0 0
    %204 = vmatprep.subr.bf16.mxu0 0
    %205 = vmatpush2.bf16.msra.mxu0 0
    %206 = vmatprep.subr.bf16.mxu0 0
    %207 = vmatpush2.bf16.msra.mxu0 0
    %208 = vmatprep.subr.bf16.mxu0 0
    %209 = vmatpush2.bf16.msra.mxu0 0
    %210 = vmatprep.subr.bf16.mxu0 0
    %211 = vmatpush2.bf16.msra.mxu0 0
    %212 = vmatprep.mubr.bf16.mxu0 0
    %213 = vmatmul.mubr.bf16.gmra.mxu0 %v175
    %v214 = vpop.f32.mrf.mxu0
    %v215 = vadd.f32 %v160, %v214
    %v216 = vpop.f32.mrf.mxu0
    %v217 = vpop.f32.mrf.mxu0
    %v218 = vadd.f32 %v160, %v217
    %v219 = vpop.f32.mrf.mxu0
    %220 = vmatprep.mubr.bf16.mxu0 0
    %221 = vmatmul.mubr.bf16.gmra.mxu0 %v178
    %v222 = vpop.f32.mrf.mxu0
    %v223 = vadd.f32 %v160, %v222
    %v224 = vpop.f32.mrf.mxu0
    %v225 = vpop.f32.mrf.mxu0
    %v226 = vadd.f32 %v160, %v225
    %v227 = vpop.f32.mrf.mxu0
    %228 = vdwg.mxu0
    %v229 = vmax.f32 %v215, 0.0
    %v230 = vmax.f32 %v218, 0.0
    %v231 = vmax.f32 %v223, 0.0
    %v232 = vmax.f32 %v226, 0.0
    %v233 = vsub.f32 %v229, %v215
    %v234 = vsub.f32 %v230, %v218
    %v235 = vsub.f32 %v231, %v223
    %v236 = vsub.f32 %v232, %v226
    %v237 = vpack.c.bf16 %v229, %v229
    %v238 = vpack.c.bf16 %v230, %v230
    %v239 = vpack.c.bf16 %v231, %v231
    %v240 = vpack.c.bf16 %v232, %v232
    %v241 = vpack.c.bf16 %v233, %v233
    %v242 = vpack.c.bf16 %v234, %v234
    %v243 = vpack.c.bf16 %v235, %v235
    %v244 = vpack.c.bf16 %v236, %v236
    %246 = vrot.lane.b32.xlu0 %v237, 96
    %v247 = vpop.permute.xlu0 %246
    %v249 = vsel %vm73, %v237, 0
    %v252 = vsel %vm73, %v247, 0
    %254 = vmatprep.subr.bf16.mxu0 0
    %255 = vmatpush1.bf16.xpose.msra.mxu0 0
    %256 = vmatprep.subr.bf16.mxu0 0
    %257 = vmatpush1.bf16.xpose.msra.mxu0 0
    %258 = vmatprep.subr.bf16.mxu0 0
    %259 = vmatpush1.bf16.xpose.msra.mxu0 0
    %260 = vmatprep.subr.bf16.mxu0 0
    %261 = vmatpush1.bf16.xpose.msra.mxu0 0
    %262 = vmatprep.subr.bf16.mxu0 0
    %263 = vmatpush1.bf16.xpose.msra.mxu0 0
    %264 = vmatprep.subr.bf16.mxu0 0
    %265 = vmatpush1.bf16.xpose.msra.mxu0 0
    %266 = vmatprep.subr.bf16.mxu0 0
    %267 = vmatpush1.bf16.xpose.msra.mxu0 0
    %268 = vmatprep.subr.bf16.mxu0 0
    %269 = vmatpush1.bf16.xpose.msra.mxu0 %v252
    %270 = vmatprep.subr.bf16.mxu0 0
    %271 = vmatpush2.bf16.xpose.msra.mxu0 0
    %272 = vmatprep.subr.bf16.mxu0 0
    %273 = vmatpush2.bf16.xpose.msra.mxu0 0
    %274 = vmatprep.subr.bf16.mxu0 0
    %275 = vmatpush2.bf16.xpose.msra.mxu0 0
    %276 = vmatprep.subr.bf16.mxu0 0
    %277 = vmatpush2.bf16.xpose.msra.mxu0 0
    %278 = vmatprep.subr.bf16.mxu0 0
    %279 = vmatpush2.bf16.xpose.msra.mxu0 0
    %280 = vmatprep.subr.bf16.mxu0 0
    %281 = vmatpush2.bf16.xpose.msra.mxu0 0
    %282 = vmatprep.subr.bf16.mxu0 0
    %283 = vmatpush2.bf16.xpose.msra.mxu0 0
    %284 = vmatprep.subr.bf16.mxu0 0
    %285 = vmatpush2.bf16.xpose.msra.mxu0 0
    %286 = vmatprep.mubr.bf16.mxu0 0
    %287 = vmatmul.mubr.bf16.gmra.mxu0 %v249
    %v288 = vpop.f32.mrf.mxu0
    %v289 = vadd.f32 0.0, %v288
    %v290 = vpop.f32.mrf.mxu0
    %v291 = vpop.f32.mrf.mxu0
    %v292 = vpop.f32.mrf.mxu0
    %293 = vdwg.mxu0
    %295 = vrot.lane.b32.xlu0 %v238, 96
    %v296 = vpop.permute.xlu0 %295
    %v298 = vsel %vm73, %v238, 0
    %v301 = vsel %vm73, %v296, 0
    %303 = vmatprep.subr.bf16.mxu0 0
    %304 = vmatpush1.bf16.xpose.msra.mxu0 0
    %305 = vmatprep.subr.bf16.mxu0 0
    %306 = vmatpush1.bf16.xpose.msra.mxu0 0
    %307 = vmatprep.subr.bf16.mxu0 0
    %308 = vmatpush1.bf16.xpose.msra.mxu0 0
    %309 = vmatprep.subr.bf16.mxu0 0
    %310 = vmatpush1.bf16.xpose.msra.mxu0 0
    %311 = vmatprep.subr.bf16.mxu0 0
    %312 = vmatpush1.bf16.xpose.msra.mxu0 0
    %313 = vmatprep.subr.bf16.mxu0 0
    %314 = vmatpush1.bf16.xpose.msra.mxu0 0
    %315 = vmatprep.subr.bf16.mxu0 0
    %316 = vmatpush1.bf16.xpose.msra.mxu0 0
    %317 = vmatprep.subr.bf16.mxu0 0
    %318 = vmatpush1.bf16.xpose.msra.mxu0 %v301
    %319 = vmatprep.subr.bf16.mxu0 0
    %320 = vmatpush2.bf16.xpose.msra.mxu0 0
    %321 = vmatprep.subr.bf16.mxu0 0
    %322 = vmatpush2.bf16.xpose.msra.mxu0 0
    %323 = vmatprep.subr.bf16.mxu0 0
    %324 = vmatpush2.bf16.xpose.msra.mxu0 0
    %325 = vmatprep.subr.bf16.mxu0 0
    %326 = vmatpush2.bf16.xpose.msra.mxu0 0
    %327 = vmatprep.subr.bf16.mxu0 0
    %328 = vmatpush2.bf16.xpose.msra.mxu0 0
    %329 = vmatprep.subr.bf16.mxu0 0
    %330 = vmatpush2.bf16.xpose.msra.mxu0 0
    %331 = vmatprep.subr.bf16.mxu0 0
    %332 = vmatpush2.bf16.xpose.msra.mxu0 0
    %333 = vmatprep.subr.bf16.mxu0 0
    %334 = vmatpush2.bf16.xpose.msra.mxu0 0
    %335 = vmatprep.mubr.bf16.mxu0 0
    %336 = vmatmul.mubr.bf16.gmra.mxu0 %v298
    %v337 = vpop.f32.mrf.mxu0
    %v338 = vadd.f32 0.0, %v337
    %v339 = vpop.f32.mrf.mxu0
    %v340 = vpop.f32.mrf.mxu0
    %v341 = vpop.f32.mrf.mxu0
    %342 = vdwg.mxu0
    %344 = vrot.lane.b32.xlu0 %v239, 96
    %v345 = vpop.permute.xlu0 %344
    %v347 = vsel %vm73, %v239, 0
    %v350 = vsel %vm73, %v345, 0
    %352 = vmatprep.subr.bf16.mxu0 0
    %353 = vmatpush1.bf16.xpose.msra.mxu0 0
    %354 = vmatprep.subr.bf16.mxu0 0
    %355 = vmatpush1.bf16.xpose.msra.mxu0 0
    %356 = vmatprep.subr.bf16.mxu0 0
    %357 = vmatpush1.bf16.xpose.msra.mxu0 0
    %358 = vmatprep.subr.bf16.mxu0 0
    %359 = vmatpush1.bf16.xpose.msra.mxu0 0
    %360 = vmatprep.subr.bf16.mxu0 0
    %361 = vmatpush1.bf16.xpose.msra.mxu0 0
    %362 = vmatprep.subr.bf16.mxu0 0
    %363 = vmatpush1.bf16.xpose.msra.mxu0 0
    %364 = vmatprep.subr.bf16.mxu0 0
    %365 = vmatpush1.bf16.xpose.msra.mxu0 0
    %366 = vmatprep.subr.bf16.mxu0 0
    %367 = vmatpush1.bf16.xpose.msra.mxu0 %v350
    %368 = vmatprep.subr.bf16.mxu0 0
    %369 = vmatpush2.bf16.xpose.msra.mxu0 0
    %370 = vmatprep.subr.bf16.mxu0 0
    %371 = vmatpush2.bf16.xpose.msra.mxu0 0
    %372 = vmatprep.subr.bf16.mxu0 0
    %373 = vmatpush2.bf16.xpose.msra.mxu0 0
    %374 = vmatprep.subr.bf16.mxu0 0
    %375 = vmatpush2.bf16.xpose.msra.mxu0 0
    %376 = vmatprep.subr.bf16.mxu0 0
    %377 = vmatpush2.bf16.xpose.msra.mxu0 0
    %378 = vmatprep.subr.bf16.mxu0 0
    %379 = vmatpush2.bf16.xpose.msra.mxu0 0
    %380 = vmatprep.subr.bf16.mxu0 0
    %381 = vmatpush2.bf16.xpose.msra.mxu0 0
    %382 = vmatprep.subr.bf16.mxu0 0
    %383 = vmatpush2.bf16.xpose.msra.mxu0 0
    %384 = vmatprep.mubr.bf16.mxu0 0
    %385 = vmatmul.mubr.bf16.gmra.mxu0 %v347
    %v386 = vpop.f32.mrf.mxu0
    %v387 = vadd.f32 0.0, %v386
    %v388 = vpop.f32.mrf.mxu0
    %v389 = vpop.f32.mrf.mxu0
    %v390 = vpop.f32.mrf.mxu0
    %391 = vdwg.mxu0
    %393 = vrot.lane.b32.xlu0 %v240, 96
    %v394 = vpop.permute.xlu0 %393
    %v396 = vsel %vm73, %v240, 0
    %v399 = vsel %vm73, %v394, 0
    %401 = vmatprep.subr.bf16.mxu0 0
    %402 = vmatpush1.bf16.xpose.msra.mxu0 0
    %403 = vmatprep.subr.bf16.mxu0 0
    %404 = vmatpush1.bf16.xpose.msra.mxu0 0
    %405 = vmatprep.subr.bf16.mxu0 0
    %406 = vmatpush1.bf16.xpose.msra.mxu0 0
    %407 = vmatprep.subr.bf16.mxu0 0
    %408 = vmatpush1.bf16.xpose.msra.mxu0 0
    %409 = vmatprep.subr.bf16.mxu0 0
    %410 = vmatpush1.bf16.xpose.msra.mxu0 0
    %411 = vmatprep.subr.bf16.mxu0 0
    %412 = vmatpush1.bf16.xpose.msra.mxu0 0
    %413 = vmatprep.subr.bf16.mxu0 0
    %414 = vmatpush1.bf16.xpose.msra.mxu0 0
    %415 = vmatprep.subr.bf16.mxu0 0
    %416 = vmatpush1.bf16.xpose.msra.mxu0 %v399
    %417 = vmatprep.subr.bf16.mxu0 0
    %418 = vmatpush2.bf16.xpose.msra.mxu0 0
    %419 = vmatprep.subr.bf16.mxu0 0
    %420 = vmatpush2.bf16.xpose.msra.mxu0 0
    %421 = vmatprep.subr.bf16.mxu0 0
    %422 = vmatpush2.bf16.xpose.msra.mxu0 0
    %423 = vmatprep.subr.bf16.mxu0 0
    %424 = vmatpush2.bf16.xpose.msra.mxu0 0
    %425 = vmatprep.subr.bf16.mxu0 0
    %426 = vmatpush2.bf16.xpose.msra.mxu0 0
    %427 = vmatprep.subr.bf16.mxu0 0
    %428 = vmatpush2.bf16.xpose.msra.mxu0 0
    %429 = vmatprep.subr.bf16.mxu0 0
    %430 = vmatpush2.bf16.xpose.msra.mxu0 0
    %431 = vmatprep.subr.bf16.mxu0 0
    %432 = vmatpush2.bf16.xpose.msra.mxu0 0
    %433 = vmatprep.mubr.bf16.mxu0 0
    %434 = vmatmul.mubr.bf16.gmra.mxu0 %v396
    %v435 = vpop.f32.mrf.mxu0
    %v436 = vadd.f32 0.0, %v435
    %v437 = vpop.f32.mrf.mxu0
    %v438 = vpop.f32.mrf.mxu0
    %v439 = vpop.f32.mrf.mxu0
    %440 = vdwg.mxu0
    %442 = vrot.lane.b32.xlu0 %v241, 96
    %v443 = vpop.permute.xlu0 %442
    %v445 = vsel %vm73, %v241, 0
    %v448 = vsel %vm73, %v443, 0
    %450 = vmatprep.subr.bf16.mxu0 0
    %451 = vmatpush1.bf16.xpose.msra.mxu0 0
    %452 = vmatprep.subr.bf16.mxu0 0
    %453 = vmatpush1.bf16.xpose.msra.mxu0 0
    %454 = vmatprep.subr.bf16.mxu0 0
    %455 = vmatpush1.bf16.xpose.msra.mxu0 0
    %456 = vmatprep.subr.bf16.mxu0 0
    %457 = vmatpush1.bf16.xpose.msra.mxu0 0
    %458 = vmatprep.subr.bf16.mxu0 0
    %459 = vmatpush1.bf16.xpose.msra.mxu0 0
    %460 = vmatprep.subr.bf16.mxu0 0
    %461 = vmatpush1.bf16.xpose.msra.mxu0 0
    %462 = vmatprep.subr.bf16.mxu0 0
    %463 = vmatpush1.bf16.xpose.msra.mxu0 0
    %464 = vmatprep.subr.bf16.mxu0 0
    %465 = vmatpush1.bf16.xpose.msra.mxu0 %v448
    %466 = vmatprep.subr.bf16.mxu0 0
    %467 = vmatpush2.bf16.xpose.msra.mxu0 0
    %468 = vmatprep.subr.bf16.mxu0 0
    %469 = vmatpush2.bf16.xpose.msra.mxu0 0
    %470 = vmatprep.subr.bf16.mxu0 0
    %471 = vmatpush2.bf16.xpose.msra.mxu0 0
    %472 = vmatprep.subr.bf16.mxu0 0
    %473 = vmatpush2.bf16.xpose.msra.mxu0 0
    %474 = vmatprep.subr.bf16.mxu0 0
    %475 = vmatpush2.bf16.xpose.msra.mxu0 0
    %476 = vmatprep.subr.bf16.mxu0 0
    %477 = vmatpush2.bf16.xpose.msra.mxu0 0
    %478 = vmatprep.subr.bf16.mxu0 0
    %479 = vmatpush2.bf16.xpose.msra.mxu0 0
    %480 = vmatprep.subr.bf16.mxu0 0
    %481 = vmatpush2.bf16.xpose.msra.mxu0 0
    %482 = vmatprep.mubr.bf16.mxu0 0
    %483 = vmatmul.mubr.bf16.gmra.mxu0 %v445
    %v484 = vpop.f32.mrf.mxu0
    %v485 = vadd.f32 0.0, %v484
    %v486 = vpop.f32.mrf.mxu0
    %v487 = vpop.f32.mrf.mxu0
    %v488 = vpop.f32.mrf.mxu0
    %489 = vdwg.mxu0
    %491 = vrot.lane.b32.xlu0 %v242, 96
    %v492 = vpop.permute.xlu0 %491
    %v494 = vsel %vm73, %v242, 0
    %v497 = vsel %vm73, %v492, 0
    %499 = vmatprep.subr.bf16.mxu0 0
    %500 = vmatpush1.bf16.xpose.msra.mxu0 0
    %501 = vmatprep.subr.bf16.mxu0 0
    %502 = vmatpush1.bf16.xpose.msra.mxu0 0
    %503 = vmatprep.subr.bf16.mxu0 0
    %504 = vmatpush1.bf16.xpose.msra.mxu0 0
    %505 = vmatprep.subr.bf16.mxu0 0
    %506 = vmatpush1.bf16.xpose.msra.mxu0 0
    %507 = vmatprep.subr.bf16.mxu0 0
    %508 = vmatpush1.bf16.xpose.msra.mxu0 0
    %509 = vmatprep.subr.bf16.mxu0 0
    %510 = vmatpush1.bf16.xpose.msra.mxu0 0
    %511 = vmatprep.subr.bf16.mxu0 0
    %512 = vmatpush1.bf16.xpose.msra.mxu0 0
    %513 = vmatprep.subr.bf16.mxu0 0
    %514 = vmatpush1.bf16.xpose.msra.mxu0 %v497
    %515 = vmatprep.subr.bf16.mxu0 0
    %516 = vmatpush2.bf16.xpose.msra.mxu0 0
    %517 = vmatprep.subr.bf16.mxu0 0
    %518 = vmatpush2.bf16.xpose.msra.mxu0 0
    %519 = vmatprep.subr.bf16.mxu0 0
    %520 = vmatpush2.bf16.xpose.msra.mxu0 0
    %521 = vmatprep.subr.bf16.mxu0 0
    %522 = vmatpush2.bf16.xpose.msra.mxu0 0
    %523 = vmatprep.subr.bf16.mxu0 0
    %524 = vmatpush2.bf16.xpose.msra.mxu0 0
    %525 = vmatprep.subr.bf16.mxu0 0
    %526 = vmatpush2.bf16.xpose.msra.mxu0 0
    %527 = vmatprep.subr.bf16.mxu0 0
    %528 = vmatpush2.bf16.xpose.msra.mxu0 0
    %529 = vmatprep.subr.bf16.mxu0 0
    %530 = vmatpush2.bf16.xpose.msra.mxu0 0
    %531 = vmatprep.mubr.bf16.mxu0 0
    %532 = vmatmul.mubr.bf16.gmra.mxu0 %v494
    %v533 = vpop.f32.mrf.mxu0
    %v534 = vadd.f32 0.0, %v533
    %v535 = vpop.f32.mrf.mxu0
    %v536 = vpop.f32.mrf.mxu0
    %v537 = vpop.f32.mrf.mxu0
    %538 = vdwg.mxu0
    %540 = vrot.lane.b32.xlu0 %v243, 96
    %v541 = vpop.permute.xlu0 %540
    %v543 = vsel %vm73, %v243, 0
    %v546 = vsel %vm73, %v541, 0
    %548 = vmatprep.subr.bf16.mxu0 0
    %549 = vmatpush1.bf16.xpose.msra.mxu0 0
    %550 = vmatprep.subr.bf16.mxu0 0
    %551 = vmatpush1.bf16.xpose.msra.mxu0 0
    %552 = vmatprep.subr.bf16.mxu0 0
    %553 = vmatpush1.bf16.xpose.msra.mxu0 0
    %554 = vmatprep.subr.bf16.mxu0 0
    %555 = vmatpush1.bf16.xpose.msra.mxu0 0
    %556 = vmatprep.subr.bf16.mxu0 0
    %557 = vmatpush1.bf16.xpose.msra.mxu0 0
    %558 = vmatprep.subr.bf16.mxu0 0
    %559 = vmatpush1.bf16.xpose.msra.mxu0 0
    %560 = vmatprep.subr.bf16.mxu0 0
    %561 = vmatpush1.bf16.xpose.msra.mxu0 0
    %562 = vmatprep.subr.bf16.mxu0 0
    %563 = vmatpush1.bf16.xpose.msra.mxu0 %v546
    %564 = vmatprep.subr.bf16.mxu0 0
    %565 = vmatpush2.bf16.xpose.msra.mxu0 0
    %566 = vmatprep.subr.bf16.mxu0 0
    %567 = vmatpush2.bf16.xpose.msra.mxu0 0
    %568 = vmatprep.subr.bf16.mxu0 0
    %569 = vmatpush2.bf16.xpose.msra.mxu0 0
    %570 = vmatprep.subr.bf16.mxu0 0
    %571 = vmatpush2.bf16.xpose.msra.mxu0 0
    %572 = vmatprep.subr.bf16.mxu0 0
    %573 = vmatpush2.bf16.xpose.msra.mxu0 0
    %574 = vmatprep.subr.bf16.mxu0 0
    %575 = vmatpush2.bf16.xpose.msra.mxu0 0
    %576 = vmatprep.subr.bf16.mxu0 0
    %577 = vmatpush2.bf16.xpose.msra.mxu0 0
    %578 = vmatprep.subr.bf16.mxu0 0
    %579 = vmatpush2.bf16.xpose.msra.mxu0 0
    %580 = vmatprep.mubr.bf16.mxu0 0
    %581 = vmatmul.mubr.bf16.gmra.mxu0 %v543
    %v582 = vpop.f32.mrf.mxu0
    %v583 = vadd.f32 0.0, %v582
    %v584 = vpop.f32.mrf.mxu0
    %v585 = vpop.f32.mrf.mxu0
    %v586 = vpop.f32.mrf.mxu0
    %587 = vdwg.mxu0
    %589 = vrot.lane.b32.xlu0 %v244, 96
    %v590 = vpop.permute.xlu0 %589
    %v592 = vsel %vm73, %v244, 0
    %v595 = vsel %vm73, %v590, 0
    %597 = vmatprep.subr.bf16.mxu0 0
    %598 = vmatpush1.bf16.xpose.msra.mxu0 0
    %599 = vmatprep.subr.bf16.mxu0 0
    %600 = vmatpush1.bf16.xpose.msra.mxu0 0
    %601 = vmatprep.subr.bf16.mxu0 0
    %602 = vmatpush1.bf16.xpose.msra.mxu0 0
    %603 = vmatprep.subr.bf16.mxu0 0
    %604 = vmatpush1.bf16.xpose.msra.mxu0 0
    %605 = vmatprep.subr.bf16.mxu0 0
    %606 = vmatpush1.bf16.xpose.msra.mxu0 0
    %607 = vmatprep.subr.bf16.mxu0 0
    %608 = vmatpush1.bf16.xpose.msra.mxu0 0
    %609 = vmatprep.subr.bf16.mxu0 0
    %610 = vmatpush1.bf16.xpose.msra.mxu0 0
    %611 = vmatprep.subr.bf16.mxu0 0
    %612 = vmatpush1.bf16.xpose.msra.mxu0 %v595
    %613 = vmatprep.subr.bf16.mxu0 0
    %614 = vmatpush2.bf16.xpose.msra.mxu0 0
    %615 = vmatprep.subr.bf16.mxu0 0
    %616 = vmatpush2.bf16.xpose.msra.mxu0 0
    %617 = vmatprep.subr.bf16.mxu0 0
    %618 = vmatpush2.bf16.xpose.msra.mxu0 0
    %619 = vmatprep.subr.bf16.mxu0 0
    %620 = vmatpush2.bf16.xpose.msra.mxu0 0
    %621 = vmatprep.subr.bf16.mxu0 0
    %622 = vmatpush2.bf16.xpose.msra.mxu0 0
    %623 = vmatprep.subr.bf16.mxu0 0
    %624 = vmatpush2.bf16.xpose.msra.mxu0 0
    %625 = vmatprep.subr.bf16.mxu0 0
    %626 = vmatpush2.bf16.xpose.msra.mxu0 0
    %627 = vmatprep.subr.bf16.mxu0 0
    %628 = vmatpush2.bf16.xpose.msra.mxu0 0
    %629 = vmatprep.mubr.bf16.mxu0 0
    %630 = vmatmul.mubr.bf16.gmra.mxu0 %v592
    %v631 = vpop.f32.mrf.mxu0
    %v632 = vadd.f32 0.0, %v631
    %v633 = vpop.f32.mrf.mxu0
    %v634 = vpop.f32.mrf.mxu0
    %v635 = vpop.f32.mrf.mxu0
    %636 = vdwg.mxu0
    %v637 = vmul.f32 %v289, 0.17677669
    %v638 = vmul.f32 %v338, 0.17677669
    %v639 = vmul.f32 %v387, 0.17677669
    %v640 = vmul.f32 %v436, 0.17677669
    %v641 = vmul.f32 %v485, 0.17677669
    %v642 = vmul.f32 %v534, 0.17677669
    %v643 = vmul.f32 %v583, 0.17677669
    %v644 = vmul.f32 %v632, 0.17677669
    %vm645 = vcmask 64512
    %v646 = vsel %vm645, %v637, -inf
    %647 = vmax.xlane.f32.xlu0 %v646
    %v648 = vpop.xlane.xlu0 %647
    %v649 = vsel %vm645, %v638, -inf
    %650 = vmax.xlane.f32.xlu0 %v649
    %v651 = vpop.xlane.xlu0 %650
    %v652 = vsel %vm645, %v639, -inf
    %653 = vmax.xlane.f32.xlu0 %v652
    %v654 = vpop.xlane.xlu0 %653
    %v655 = vsel %vm645, %v640, -inf
    %656 = vmax.xlane.f32.xlu0 %v655
    %v657 = vpop.xlane.xlu0 %656
    %v658 = vsel %vm645, %v641, -inf
    %659 = vmax.xlane.f32.xlu0 %v658
    %v660 = vpop.xlane.xlu0 %659
    %v661 = vsel %vm645, %v642, -inf
    %662 = vmax.xlane.f32.xlu0 %v661
    %v663 = vpop.xlane.xlu0 %662
    %v664 = vsel %vm645, %v643, -inf
    %665 = vmax.xlane.f32.xlu0 %v664
    %v666 = vpop.xlane.xlu0 %665
    %v667 = vsel %vm645, %v644, -inf
    %668 = vmax.xlane.f32.xlu0 %v667
    %v669 = vpop.xlane.xlu0 %668
    %v670 = vsub.f32 %v637, %v648
    %v671 = vsub.f32 %v638, %v651
    %v672 = vsub.f32 %v639, %v654
    %v673 = vsub.f32 %v640, %v657
    %v674 = vsub.f32 %v641, %v660
    %v675 = vsub.f32 %v642, %v663
    %v676 = vsub.f32 %v643, %v666
    %v677 = vsub.f32 %v644, %v669
    %v678 = vmul.f32 %v670, 1.442695
    %v679 = vpow.pop %v678
    %v680 = vmul.f32 %v671, 1.442695
    %v681 = vpow.pop %v680
    %v682 = vmul.f32 %v672, 1.442695
    %v683 = vpow.pop %v682
    %v684 = vmul.f32 %v673, 1.442695
    %v685 = vpow.pop %v684
    %v686 = vmul.f32 %v674, 1.442695
    %v687 = vpow.pop %v686
    %v688 = vmul.f32 %v675, 1.442695
    %v689 = vpow.pop %v688
    %v690 = vmul.f32 %v676, 1.442695
    %v691 = vpow.pop %v690
    %v692 = vmul.f32 %v677, 1.442695
    %v693 = vpow.pop %v692
    %v694 = vsel %vm645, %v679, 0.0
    %695 = vadd.xlane.f32.xlu0 %v694
    %v696 = vpop.xlane.xlu0 %695
    %v697 = vsel %vm645, %v681, 0.0
    %698 = vadd.xlane.f32.xlu0 %v697
    %v699 = vpop.xlane.xlu0 %698
    %v700 = vsel %vm645, %v683, 0.0
    %701 = vadd.xlane.f32.xlu0 %v700
    %v702 = vpop.xlane.xlu0 %701
    %v703 = vsel %vm645, %v685, 0.0
    %704 = vadd.xlane.f32.xlu0 %v703
    %v705 = vpop.xlane.xlu0 %704
    %v706 = vsel %vm645, %v687, 0.0
    %707 = vadd.xlane.f32.xlu0 %v706
    %v708 = vpop.xlane.xlu0 %707
    %v709 = vsel %vm645, %v689, 0.0
    %710 = vadd.xlane.f32.xlu0 %v709
    %v711 = vpop.xlane.xlu0 %710
    %v712 = vsel %vm645, %v691, 0.0
    %713 = vadd.xlane.f32.xlu0 %v712
    %v714 = vpop.xlane.xlu0 %713
    %v715 = vsel %vm645, %v693, 0.0
    %716 = vadd.xlane.f32.xlu0 %v715
    %v717 = vpop.xlane.xlu0 %716
    %v718 = vrcp.pop %v696
    %v719 = vrcp.pop %v699
    %v720 = vrcp.pop %v702
    %v721 = vrcp.pop %v705
    %v722 = vrcp.pop %v708
    %v723 = vrcp.pop %v711
    %v724 = vrcp.pop %v714
    %v725 = vrcp.pop %v717
    %v726 = vmul.f32 %v679, %v718
    %v727 = vmul.f32 %v681, %v719
    %v728 = vmul.f32 %v683, %v720
    %v729 = vmul.f32 %v685, %v721
    %v730 = vmul.f32 %v687, %v722
    %v731 = vmul.f32 %v689, %v723
    %v732 = vmul.f32 %v691, %v724
    %v733 = vmul.f32 %v693, %v725
    %v734 = vsub.f32 %v726, %v730
    %v735 = vsub.f32 %v727, %v731
    %v736 = vsub.f32 %v728, %v732
    %v737 = vsub.f32 %v729, %v733
    %v738 = vpack.c.bf16 %v734, %v734
    %v739 = vpack.c.bf16 %v735, %v735
    %v740 = vpack.c.bf16 %v736, %v736
    %v741 = vpack.c.bf16 %v737, %v737
    %v742 = vpack.c.bf16 %v215, %v215
    %v743 = vpack.c.bf16 %v218, %v218
    %v744 = vpack.c.bf16 %v223, %v223
    %v745 = vpack.c.bf16 %v226, %v226
    %747 = vrot.lane.b32.xlu0 %v742, 64
    %v748 = vpop.permute.xlu0 %747
    %v750 = vsel %vm645, %v738, 0
    %vm752 = vcmask 1043456
    %v754 = vsel %vm752, %v748, 0
    %756 = vmatprep.subr.bf16.mxu0 0
    %757 = vmatpush1.bf16.msra.mxu0 0
    %758 = vmatprep.subr.bf16.mxu0 0
    %759 = vmatpush1.bf16.msra.mxu0 0
    %760 = vmatprep.subr.bf16.mxu0 0
    %761 = vmatpush1.bf16.msra.mxu0 0
    %762 = vmatprep.subr.bf16.mxu0 0
    %763 = vmatpush1.bf16.msra.mxu0 0
    %764 = vmatprep.subr.bf16.mxu0 0
    %765 = vmatpush1.bf16.msra.mxu0 0
    %766 = vmatprep.subr.bf16.mxu0 0
    %767 = vmatpush1.bf16.msra.mxu0 0
    %768 = vmatprep.subr.bf16.mxu0 0
    %769 = vmatpush1.bf16.msra.mxu0 0
    %770 = vmatprep.subr.bf16.mxu0 0
    %771 = vmatpush1.bf16.msra.mxu0 %v754
    %772 = vmatprep.subr.bf16.mxu0 0
    %773 = vmatpush2.bf16.msra.mxu0 0
    %774 = vmatprep.subr.bf16.mxu0 0
    %775 = vmatpush2.bf16.msra.mxu0 0
    %776 = vmatprep.subr.bf16.mxu0 0
    %777 = vmatpush2.bf16.msra.mxu0 0
    %778 = vmatprep.subr.bf16.mxu0 0
    %779 = vmatpush2.bf16.msra.mxu0 0
    %780 = vmatprep.subr.bf16.mxu0 0
    %781 = vmatpush2.bf16.msra.mxu0 0
    %782 = vmatprep.subr.bf16.mxu0 0
    %783 = vmatpush2.bf16.msra.mxu0 0
    %784 = vmatprep.subr.bf16.mxu0 0
    %785 = vmatpush2.bf16.msra.mxu0 0
    %786 = vmatprep.subr.bf16.mxu0 0
    %787 = vmatpush2.bf16.msra.mxu0 0
    %788 = vmatprep.mubr.bf16.mxu0 0
    %789 = vmatmul.mubr.bf16.gmra.mxu0 %v750
    %v790 = vpop.f32.mrf.mxu0
    %v791 = vadd.f32 0.0, %v790
    %v792 = vpop.f32.mrf.mxu0
    %v793 = vpop.f32.mrf.mxu0
    %v794 = vpop.f32.mrf.mxu0
    %795 = vdwg.mxu0
    %797 = vrot.lane.b32.xlu0 %v743, 64
    %v798 = vpop.permute.xlu0 %797
    %v800 = vsel %vm645, %v739, 0
    %v803 = vsel %vm752, %v798, 0
    %805 = vmatprep.subr.bf16.mxu0 0
    %806 = vmatpush1.bf16.msra.mxu0 0
    %807 = vmatprep.subr.bf16.mxu0 0
    %808 = vmatpush1.bf16.msra.mxu0 0
    %809 = vmatprep.subr.bf16.mxu0 0
    %810 = vmatpush1.bf16.msra.mxu0 0
    %811 = vmatprep.subr.bf16.mxu0 0
    %812 = vmatpush1.bf16.msra.mxu0 0
    %813 = vmatprep.subr.bf16.mxu0 0
    %814 = vmatpush1.bf16.msra.mxu0 0
    %815 = vmatprep.subr.bf16.mxu0 0
    %816 = vmatpush1.bf16.msra.mxu0 0
    %817 = vmatprep.subr.bf16.mxu0 0
    %818 = vmatpush1.bf16.msra.mxu0 0
    %819 = vmatprep.subr.bf16.mxu0 0
    %820 = vmatpush1.bf16.msra.mxu0 %v803
    %821 = vmatprep.subr.bf16.mxu0 0
    %822 = vmatpush2.bf16.msra.mxu0 0
    %823 = vmatprep.subr.bf16.mxu0 0
    %824 = vmatpush2.bf16.msra.mxu0 0
    %825 = vmatprep.subr.bf16.mxu0 0
    %826 = vmatpush2.bf16.msra.mxu0 0
    %827 = vmatprep.subr.bf16.mxu0 0
    %828 = vmatpush2.bf16.msra.mxu0 0
    %829 = vmatprep.subr.bf16.mxu0 0
    %830 = vmatpush2.bf16.msra.mxu0 0
    %831 = vmatprep.subr.bf16.mxu0 0
    %832 = vmatpush2.bf16.msra.mxu0 0
    %833 = vmatprep.subr.bf16.mxu0 0
    %834 = vmatpush2.bf16.msra.mxu0 0
    %835 = vmatprep.subr.bf16.mxu0 0
    %836 = vmatpush2.bf16.msra.mxu0 0
    %837 = vmatprep.mubr.bf16.mxu0 0
    %838 = vmatmul.mubr.bf16.gmra.mxu0 %v800
    %v839 = vpop.f32.mrf.mxu0
    %v840 = vadd.f32 0.0, %v839
    %v841 = vpop.f32.mrf.mxu0
    %v842 = vpop.f32.mrf.mxu0
    %v843 = vpop.f32.mrf.mxu0
    %844 = vdwg.mxu0
    %846 = vrot.lane.b32.xlu0 %v744, 64
    %v847 = vpop.permute.xlu0 %846
    %v849 = vsel %vm645, %v740, 0
    %v852 = vsel %vm752, %v847, 0
    %854 = vmatprep.subr.bf16.mxu0 0
    %855 = vmatpush1.bf16.msra.mxu0 0
    %856 = vmatprep.subr.bf16.mxu0 0
    %857 = vmatpush1.bf16.msra.mxu0 0
    %858 = vmatprep.subr.bf16.mxu0 0
    %859 = vmatpush1.bf16.msra.mxu0 0
    %860 = vmatprep.subr.bf16.mxu0 0
    %861 = vmatpush1.bf16.msra.mxu0 0
    %862 = vmatprep.subr.bf16.mxu0 0
    %863 = vmatpush1.bf16.msra.mxu0 0
    %864 = vmatprep.subr.bf16.mxu0 0
    %865 = vmatpush1.bf16.msra.mxu0 0
    %866 = vmatprep.subr.bf16.mxu0 0
    %867 = vmatpush1.bf16.msra.mxu0 0
    %868 = vmatprep.subr.bf16.mxu0 0
    %869 = vmatpush1.bf16.msra.mxu0 %v852
    %870 = vmatprep.subr.bf16.mxu0 0
    %871 = vmatpush2.bf16.msra.mxu0 0
    %872 = vmatprep.subr.bf16.mxu0 0
    %873 = vmatpush2.bf16.msra.mxu0 0
    %874 = vmatprep.subr.bf16.mxu0 0
    %875 = vmatpush2.bf16.msra.mxu0 0
    %876 = vmatprep.subr.bf16.mxu0 0
    %877 = vmatpush2.bf16.msra.mxu0 0
    %878 = vmatprep.subr.bf16.mxu0 0
    %879 = vmatpush2.bf16.msra.mxu0 0
    %880 = vmatprep.subr.bf16.mxu0 0
    %881 = vmatpush2.bf16.msra.mxu0 0
    %882 = vmatprep.subr.bf16.mxu0 0
    %883 = vmatpush2.bf16.msra.mxu0 0
    %884 = vmatprep.subr.bf16.mxu0 0
    %885 = vmatpush2.bf16.msra.mxu0 0
    %886 = vmatprep.mubr.bf16.mxu0 0
    %887 = vmatmul.mubr.bf16.gmra.mxu0 %v849
    %v888 = vpop.f32.mrf.mxu0
    %v889 = vadd.f32 0.0, %v888
    %v890 = vpop.f32.mrf.mxu0
    %v891 = vpop.f32.mrf.mxu0
    %v892 = vpop.f32.mrf.mxu0
    %893 = vdwg.mxu0
    %895 = vrot.lane.b32.xlu0 %v745, 64
    %v896 = vpop.permute.xlu0 %895
    %v898 = vsel %vm645, %v741, 0
    %v901 = vsel %vm752, %v896, 0
    %903 = vmatprep.subr.bf16.mxu0 0
    %904 = vmatpush1.bf16.msra.mxu0 0
    %905 = vmatprep.subr.bf16.mxu0 0
    %906 = vmatpush1.bf16.msra.mxu0 0
    %907 = vmatprep.subr.bf16.mxu0 0
    %908 = vmatpush1.bf16.msra.mxu0 0
    %909 = vmatprep.subr.bf16.mxu0 0
    %910 = vmatpush1.bf16.msra.mxu0 0
    %911 = vmatprep.subr.bf16.mxu0 0
    %912 = vmatpush1.bf16.msra.mxu0 0
    %913 = vmatprep.subr.bf16.mxu0 0
    %914 = vmatpush1.bf16.msra.mxu0 0
    %915 = vmatprep.subr.bf16.mxu0 0
    %916 = vmatpush1.bf16.msra.mxu0 0
    %917 = vmatprep.subr.bf16.mxu0 0
    %918 = vmatpush1.bf16.msra.mxu0 %v901
    %919 = vmatprep.subr.bf16.mxu0 0
    %920 = vmatpush2.bf16.msra.mxu0 0
    %921 = vmatprep.subr.bf16.mxu0 0
    %922 = vmatpush2.bf16.msra.mxu0 0
    %923 = vmatprep.subr.bf16.mxu0 0
    %924 = vmatpush2.bf16.msra.mxu0 0
    %925 = vmatprep.subr.bf16.mxu0 0
    %926 = vmatpush2.bf16.msra.mxu0 0
    %927 = vmatprep.subr.bf16.mxu0 0
    %928 = vmatpush2.bf16.msra.mxu0 0
    %929 = vmatprep.subr.bf16.mxu0 0
    %930 = vmatpush2.bf16.msra.mxu0 0
    %931 = vmatprep.subr.bf16.mxu0 0
    %932 = vmatpush2.bf16.msra.mxu0 0
    %933 = vmatprep.subr.bf16.mxu0 0
    %934 = vmatpush2.bf16.msra.mxu0 0
    %935 = vmatprep.mubr.bf16.mxu0 0
    %936 = vmatmul.mubr.bf16.gmra.mxu0 %v898
    %v937 = vpop.f32.mrf.mxu0
    %v938 = vadd.f32 0.0, %v937
    %v939 = vpop.f32.mrf.mxu0
    %v940 = vpop.f32.mrf.mxu0
    %v941 = vpop.f32.mrf.mxu0
    %942 = vdwg.mxu0
    %v943 = vpack.c.bf16 %v840, %v791
    %v944 = vpack.c.bf16 %v938, %v889
    %v945 = vld [vmem:[#allocation7] sm:$0xf]
    %v946 = vld [vmem:[#allocation7 + $0x4] sm:$0xf]
    %v947 = vld [vmem:[#allocation7 + $0x8] sm:$0xf]
    %v948 = vld [vmem:[#allocation7 + $0xc] sm:$0xf]
    %v949 = vld [vmem:[%s4] sm:$0x1]
    %v951 = vlaneseq
    %v952 = vshrl.u32 %v951, 7
    %v953 = vsub.s32 0, %v952
    %v954 = vrot.slane %v949, %v953
    %v960 = vunpack.c.l.b16 %v945
    %v961 = vunpack.c.l.b16 %v946
    %v962 = vunpack.c.l.b16 %v947
    %v963 = vunpack.c.l.b16 %v948
    %v964 = vpack.c.b16 %v961, %v960
    %v965 = vpack.c.b16 %v963, %v962
    %v969 = vsel %vm73, %v943, 0
    %v972 = vsel %vm73, %v944, 0
    %974 = vmatprep.subr.bf16.mxu0 0
    %975 = vmatpush1.bf16.msra.mxu0 0
    %976 = vmatprep.subr.bf16.mxu0 0
    %977 = vmatpush1.bf16.msra.mxu0 0
    %978 = vmatprep.subr.bf16.mxu0 0
    %979 = vmatpush1.bf16.msra.mxu0 0
    %980 = vmatprep.subr.bf16.mxu0 0
    %981 = vmatpush1.bf16.msra.mxu0 0
    %982 = vmatprep.subr.bf16.mxu0 0
    %983 = vmatpush1.bf16.msra.mxu0 0
    %984 = vmatprep.subr.bf16.mxu0 0
    %985 = vmatpush1.bf16.msra.mxu0 0
    %986 = vmatprep.subr.bf16.mxu0 0
    %987 = vmatpush1.bf16.msra.mxu0 %v965
    %988 = vmatprep.subr.bf16.mxu0 0
    %989 = vmatpush1.bf16.msra.mxu0 %v964
    %990 = vmatprep.subr.bf16.mxu0 0
    %991 = vmatpush2.bf16.msra.mxu0 0
    %992 = vmatprep.subr.bf16.mxu0 0
    %993 = vmatpush2.bf16.msra.mxu0 0
    %994 = vmatprep.subr.bf16.mxu0 0
    %995 = vmatpush2.bf16.msra.mxu0 0
    %996 = vmatprep.subr.bf16.mxu0 0
    %997 = vmatpush2.bf16.msra.mxu0 0
    %998 = vmatprep.subr.bf16.mxu0 0
    %999 = vmatpush2.bf16.msra.mxu0 0
    %1000 = vmatprep.subr.bf16.mxu0 0
    %1001 = vmatpush2.bf16.msra.mxu0 0
    %1002 = vmatprep.subr.bf16.mxu0 0
    %1003 = vmatpush2.bf16.msra.mxu0 0
    %1004 = vmatprep.subr.bf16.mxu0 0
    %1005 = vmatpush2.bf16.msra.mxu0 0
    %1006 = vmatprep.mubr.bf16.mxu0 0
    %1007 = vmatmul.mubr.bf16.gmra.mxu0 %v969
    %v1008 = vpop.f32.mrf.mxu0
    %v1009 = vadd.f32 %v954, %v1008
    %v1010 = vpop.f32.mrf.mxu0
    %v1011 = vpop.f32.mrf.mxu0
    %v1012 = vadd.f32 %v954, %v1011
    %v1013 = vpop.f32.mrf.mxu0
    %1014 = vmatprep.mubr.bf16.mxu0 0
    %1015 = vmatmul.mubr.bf16.gmra.mxu0 %v972
    %v1016 = vpop.f32.mrf.mxu0
    %v1017 = vadd.f32 %v954, %v1016
    %v1018 = vpop.f32.mrf.mxu0
    %v1019 = vpop.f32.mrf.mxu0
    %v1020 = vadd.f32 %v954, %v1019
    %v1021 = vpop.f32.mrf.mxu0
    %1022 = vdwg.mxu0
    %v1023 = vadd.f32 %v145, %v1009
    %v1024 = vadd.f32 %v146, %v1012
    %v1025 = vadd.f32 %v147, %v1017
    %v1026 = vadd.f32 %v148, %v1020
    %1027 = vst.msk [vmem:[#allocation8] sm:$0xff] %vm73, %v1023
    %1028 = vst.msk [vmem:[#allocation8 + $0x8] sm:$0xff] %vm73, %v1024
    %1029 = vst.msk [vmem:[#allocation8 + $0x10] sm:$0xff] %vm73, %v1025
    %1030 = vst.msk [vmem:[#allocation8 + $0x18] sm:$0xff] %vm73, %v1026
    // Predicated region
    $region42: #{tpu_custom_call.1} parent=1 // pred_check
      _
    $region43: #{tpu_custom_call.1} parent=1 // pred_check_branch
      %1032 = sbr.rel (0) target = $region45
    $region44: #{tpu_custom_call.1} parent=1 // pred_region
      %s1034 = ssub.s32 512, 512
      %1035 = vsyncadd [#allocation4], %s1034
      %s1036 = sshll.u32 [#allocation8], 4
      %s1037 = int_to_ptr.vmem [resolvable:$true] %s1036
      %1042 = dma.vmem_to_hbm [thread:$0]  %s1037, 512, %s7, [#allocation4], 128, 128, 8
    $region45: #{tpu_custom_call.1} parent=1 // pred_fallthru
      _
    // Predicated region
    $region46: #{tpu_custom_call.1} parent=1 // pred_check
      _
    $region47: #{tpu_custom_call.1} parent=1 // pred_check_branch
      %1044 = sbr.rel (0) target = $region49
    $region48: #{tpu_custom_call.1} parent=1 // pred_region
      %1045 = dma.done [#allocation4], 512
    $region49: #{tpu_custom_call.1} parent=1 // pred_fallthru
      _
    %1046 = vsyncpa [#allocation3], 1
    %1047 = vsyncpa [#allocation6], 1
    %1048 = vsyncpa [#allocation4], 1

</llo_original>
